<compile_context>
chip_gen: v7x
topology: tpu7x:2x2x1
jax: 0.10.0
libtpu: 0.0.40
codegen_flags: <defaults>
</compile_context>

<pallas_src>
import functools

import jax
import jax.numpy as jnp
from jax import lax
from jax.experimental import pallas as pl
from jax.experimental.pallas import tpu as pltpu


# -----------------------------------------------------------------------------
# Fused kernel: one (image, row-tile) per grid step.
# -----------------------------------------------------------------------------
def _fused_ir_kernel(TH, THo, THp2, W, Wp, Wo, stride, has_expand, use_res,
                     mm_dtype, *refs):
    it = iter(refs)
    xm_ref = next(it)                   # (1, TH, Wp, Cin) main rows
    xt_ref = next(it)                   # (1, 1, Wp, Cin) row above tile (clamped)
    xb_ref = next(it)                   # (1, 1, Wp, Cin) row below tile (clamped)
    if has_expand:
        w_exp_ref = next(it)            # (Cin, hid)  mm_dtype (BN folded)
        b1_ref = next(it)               # (1, hid)    f32
    w_dw_ref = next(it)                 # (9, hid)    f32 (BN folded)
    b2_ref = next(it)                   # (1, hid)
    w_proj_ref = next(it)               # (hid, oup)  mm_dtype (BN folded)
    b3_ref = next(it)                   # (1, oup)
    o_ref = next(it)                    # (1, THo, Wo, oup)
    xbuf_ref = next(it)                 # (THp2, Wp, Cin) scratch
    dec_ref = next(it) if stride == 2 else None   # (THo*W, hid) scratch

    t = pl.program_id(1)
    nt = pl.num_programs(1)

    x = xm_ref[0]                       # (TH, Wp, Cin), f32, W padded by 1 halo col
    cin = x.shape[-1]

    # ---- assemble input rows [-1 .. TH] in a tiny (Cin-wide) scratch ---------
    xbuf_ref[0:1] = xt_ref[0]
    xbuf_ref[1:TH + 1] = x
    xbuf_ref[TH + 1:TH + 2] = xb_ref[0]
    if THp2 > TH + 2:                   # dummy row for the odd-TH stride-2 reshape
        xbuf_ref[TH + 2:TH + 3] = xb_ref[0]
    x_ext = xbuf_ref[...]               # (THp2, Wp, Cin)

    # ---- 1x1 expand + folded BN + ReLU6 (MXU: mm_dtype operands, f32 acc) ----
    if has_expand:
        h2d = jnp.dot(x_ext.reshape(THp2 * Wp, cin).astype(mm_dtype),
                      w_exp_ref[...], preferred_element_type=jnp.float32)
        h2d = jnp.clip(h2d + b1_ref[...], 0.0, 6.0)
        hid = h2d.shape[-1]
        h_ext = h2d.reshape(THp2, Wp, hid)
    else:
        hid = cin
        h_ext = x_ext.astype(jnp.float32)

    # ---- zero the depthwise halo: out-of-image rows + the two pad columns ----
    rows = lax.broadcasted_iota(jnp.int32, (THp2, Wp, 1), 0)
    cols = lax.broadcasted_iota(jnp.int32, (THp2, Wp, 1), 1)
    keep = jnp.logical_and(
        jnp.logical_and(jnp.logical_or(rows != 0, t > 0),
                        jnp.logical_or(rows != TH + 1, t < nt - 1)),
        jnp.logical_and(cols >= 1, cols <= W))
    h_ext = jnp.where(keep, h_ext, 0.0)

    # ---- 3x3 depthwise + folded BN + ReLU6 -----------------------------------
    # stride=2 row decimation happens inside the tap loop (only output rows are
    # accumulated); column taps are static value slices of the W-padded rows.
    wdw = w_dw_ref[...]                                    # load once (9, hid)
    acc = jnp.zeros((THo, W, hid), jnp.float32)
    for ki in range(3):
        if stride == 1:
            rk = h_ext[ki:ki + THo]                        # (THo, Wp, hid)
        else:
            rk = h_ext[ki:ki + 2 * THo].reshape(THo, 2, Wp, hid)[:, 0]
        for kj in range(3):
            acc = acc + rk[:, kj:kj + W, :] * wdw[ki * 3 + kj, :]
    dw = jnp.clip(acc + b2_ref[...], 0.0, 6.0)             # (THo, W, hid)

    # ---- stride-2 column decimation (even cols == even flat rows; W even) ----
    if stride == 1:
        hproj = dw.reshape(THo * W, hid)
    else:
        dec_ref[...] = dw.reshape(THo * W, hid)
        hproj = dec_ref[pl.ds(0, THo * Wo, stride=2), :]   # (THo*Wo, hid)

    # ---- 1x1 project + folded BN (+ fused residual) --------------------------
    y2d = jnp.dot(hproj.astype(mm_dtype), w_proj_ref[...],
                  preferred_element_type=jnp.float32)
    y2d = y2d + b3_ref[...]
    if use_res:                                            # stride==1, inp==oup
        y2d = y2d + x[:, 1:W + 1, :].reshape(THo * Wo, cin)

    if Wo % 8 == 0 or THo == 1:
        o_ref[0] = y2d.reshape(THo, Wo, -1).astype(o_ref.dtype)
    else:
        # keep value reshapes sublane-aligned when Wo is not a multiple of 8
        for io in range(THo):
            o_ref[0, io] = y2d[io * Wo:(io + 1) * Wo, :].astype(o_ref.dtype)


def _pick_row_tile(H, stride, target):
    """Largest row tile <= target that divides H (even for stride=2 tiling)."""
    best = H
    for cand in range(min(target, H), 0, -1):
        if H % cand != 0:
            continue
        if stride == 2 and cand % 2 != 0 and cand != H:
            continue
        best = cand
        break
    return best


# -----------------------------------------------------------------------------
# Wrapper: NCHW in / NCHW out (matches the PyTorch module).  BN scales are
# folded into the conv weights here, once, outside the kernel.
# -----------------------------------------------------------------------------
def inverted_residual_forward(x_nchw, params, inp, oup, stride, expand_ratio,
                              *, matmul_dtype=jnp.bfloat16, row_tile=16):
    assert stride in (1, 2)
    hidden = int(round(inp * expand_ratio))
    has_expand = expand_ratio != 1
    use_res = (stride == 1) and (inp == oup)

    x = jnp.transpose(x_nchw, (0, 2, 3, 1)).astype(jnp.float32)   # NCHW -> NHWC
    N, H, W, _ = x.shape
    if stride == 2 and W % 2 != 0:
        # TODO(synk): odd-W stride-2 feature maps are not produced by MobileNetV2.
        raise NotImplementedError("stride=2 with odd W is not supported")
    Ho = (H - 1) // stride + 1
    Wo = (W - 1) // stride + 1

    TH = _pick_row_tile(H, stride, row_tile)
    NT = H // TH
    THo = (TH + stride - 1) // stride
    assert NT * THo == Ho
    extra = 1 if (stride == 2 and TH % 2 == 1) else 0
    THp2 = TH + 2 + extra

    # Pad W by 1 halo column each side, rounded up to a multiple of 8 so the
    # in-kernel (rows, W) <-> (rows*W) reshapes stay sublane-aligned.
    Wp = ((W + 2 + 7) // 8) * 8
    xp = jnp.pad(x, ((0, 0), (0, 0), (1, Wp - W - 1), (0, 0)))

    # fold BN scales into conv weights (inference mode)
    s2, b2 = params["bn2"]
    s3, b3 = params["bn3"]
    w_dw = (params["w_dw"].reshape(9, hidden) * s2[None, :]).astype(jnp.float32)
    w_proj = (params["w_proj"] * s3[None, :]).astype(matmul_dtype)

    def wspec(shape):
        return pl.BlockSpec(shape, lambda n, t: (0, 0))

    in_specs = [
        pl.BlockSpec((1, TH, Wp, inp), lambda n, t: (n, t, 0, 0)),
        pl.BlockSpec((1, 1, Wp, inp),
                     lambda n, t: (n, jnp.maximum(t * TH - 1, 0), 0, 0)),
        pl.BlockSpec((1, 1, Wp, inp),
                     lambda n, t: (n, jnp.minimum(t * TH + TH, H - 1), 0, 0)),
    ]
    args = [xp, xp, xp]
    if has_expand:
        s1, b1 = params["bn1"]
        w_exp = (params["w_expand"] * s1[None, :]).astype(matmul_dtype)
        in_specs += [wspec((inp, hidden)), wspec((1, hidden))]
        args += [w_exp, b1.reshape(1, hidden).astype(jnp.float32)]
    in_specs += [wspec((9, hidden)), wspec((1, hidden)),
                 wspec((hidden, oup)), wspec((1, oup))]
    args += [w_dw, b2.reshape(1, hidden).astype(jnp.float32),
             w_proj, b3.reshape(1, oup).astype(jnp.float32)]

    scratch = [pltpu.VMEM((THp2, Wp, inp), jnp.float32)]
    if stride == 2:
        scratch.append(pltpu.VMEM((THo * W, hidden), jnp.float32))

    # explicit VMEM budget (hidden-sized live values dominate; blocks double-buffer)
    f32b = 4
    est = (7 * THp2 * Wp * hidden * f32b
           + 5 * THp2 * Wp * inp * f32b
           + 3 * THo * Wo * oup * f32b
           + (1 if stride == 2 else 0) * THo * W * hidden * f32b
           + 2 * (inp * hidden + hidden * oup + 13 * hidden + 2 * oup) * f32b)
    vmem_limit = int(min(max(2 * est, 32 * 1024 * 1024), 64 * 1024 * 1024))

    kernel = functools.partial(_fused_ir_kernel, TH, THo, THp2, W, Wp, Wo,
                               stride, has_expand, use_res, matmul_dtype)
    y = pl.pallas_call(
        kernel,
        out_shape=jax.ShapeDtypeStruct((N, Ho, Wo, oup), x.dtype),
        grid_spec=pltpu.PrefetchScalarGridSpec(
            num_scalar_prefetch=0,
            grid=(N, NT),
            in_specs=in_specs,
            out_specs=pl.BlockSpec((1, THo, Wo, oup), lambda n, t: (n, t, 0, 0)),
            scratch_shapes=scratch,
        ),
        compiler_params=pltpu.CompilerParams(
            dimension_semantics=("parallel", "parallel"),
            vmem_limit_bytes=vmem_limit),
    )(*args)
    return jnp.transpose(y, (0, 3, 1, 2))          # NHWC -> NCHW


# -----------------------------------------------------------------------------
# Deterministic synthetic parameters (inference-mode BatchNorm, folded).
# -----------------------------------------------------------------------------
def _bn_fold(keys, c):
    kg, kb, km, kv = keys
    gamma = 1.0 + 0.1 * jax.random.normal(kg, (c,), jnp.float32)
    beta = 0.1 * jax.random.normal(kb, (c,), jnp.float32)
    mean = 0.1 * jax.random.normal(km, (c,), jnp.float32)
    var = jax.random.uniform(kv, (c,), jnp.float32, minval=0.5, maxval=1.5)
    scale = gamma * lax.rsqrt(var + 1e-5)
    bias = beta - mean * scale
    return scale, bias


def init_inverted_residual_params(key, inp, oup, expand_ratio):
    hidden = int(round(inp * expand_ratio))
    keys = jax.random.split(key, 16)
    params = {}
    if expand_ratio != 1:
        params["w_expand"] = 0.1 * jax.random.normal(keys[0], (inp, hidden), jnp.float32)
        params["bn1"] = _bn_fold(keys[1:5], hidden)
    params["w_dw"] = 0.1 * jax.random.normal(keys[5], (3, 3, hidden), jnp.float32)
    params["bn2"] = _bn_fold(keys[6:10], hidden)
    params["w_proj"] = 0.1 * jax.random.normal(keys[10], (hidden, oup), jnp.float32)
    params["bn3"] = _bn_fold(keys[11:15], oup)
    return params


# -----------------------------------------------------------------------------
# Pure-JAX reference (for correctness check only).
# -----------------------------------------------------------------------------
def reference_forward(x_nchw, params, inp, oup, stride, expand_ratio):
    hidden = int(round(inp * expand_ratio))
    x = jnp.transpose(x_nchw, (0, 2, 3, 1))
    h = x
    if expand_ratio != 1:
        h = jnp.einsum("nhwc,cd->nhwd", h, params["w_expand"])
        s, b = params["bn1"]
        h = jnp.clip(h * s + b, 0.0, 6.0)
    wdn = params["w_dw"].reshape(3, 3, 1, hidden)
    h = lax.conv_general_dilated(h, wdn, (stride, stride), ((1, 1), (1, 1)),
                                 dimension_numbers=("NHWC", "HWIO", "NHWC"),
                                 feature_group_count=hidden)
    s, b = params["bn2"]
    h = jnp.clip(h * s + b, 0.0, 6.0)
    h = jnp.einsum("nhwc,cd->nhwd", h, params["w_proj"])
    s, b = params["bn3"]
    h = h * s + b
    if stride == 1 and inp == oup:
        h = h + x
    return jnp.transpose(h, (0, 3, 1, 2))


if __name__ == "__main__":
    key = jax.random.PRNGKey(0)
    kx1, kx3, kp1, kp2, kp3 = jax.random.split(key, 5)

    # Config 1: stride=1, inp==oup (residual), expand_ratio=2, two H row-tiles.
    x1 = jax.random.normal(kx1, (2, 8, 16, 16), jnp.float32)
    p1 = init_inverted_residual_params(kp1, inp=8, oup=8, expand_ratio=2)
    y1 = inverted_residual_forward(x1, p1, inp=8, oup=8, stride=1, expand_ratio=2,
                                   matmul_dtype=jnp.float32, row_tile=8)
    jax.block_until_ready(y1)
    r1 = reference_forward(x1, p1, inp=8, oup=8, stride=1, expand_ratio=2)
    assert y1.shape == (2, 8, 16, 16)
    assert jnp.allclose(y1, r1, rtol=1e-3, atol=1e-3), float(jnp.max(jnp.abs(y1 - r1)))

    # Config 2: stride=2, expand_ratio=1 (no expansion conv), inp != oup, two tiles.
    p2 = init_inverted_residual_params(kp2, inp=8, oup=16, expand_ratio=1)
    y2 = inverted_residual_forward(x1, p2, inp=8, oup=16, stride=2, expand_ratio=1,
                                   matmul_dtype=jnp.float32, row_tile=8)
    jax.block_until_ready(y2)
    r2 = reference_forward(x1, p2, inp=8, oup=16, stride=2, expand_ratio=1)
    assert y2.shape == (2, 16, 8, 8)
    assert jnp.allclose(y2, r2, rtol=1e-3, atol=1e-3), float(jnp.max(jnp.abs(y2 - r2)))

    # Config 3: realistic MobileNetV2 layer (56x56, hidden=96), stride=2, 4 tiles.
    x3 = jax.random.normal(kx3, (2, 16, 56, 56), jnp.float32)
    p3 = init_inverted_residual_params(kp3, inp=16, oup=24, expand_ratio=6)
    r3 = reference_forward(x3, p3, inp=16, oup=24, stride=2, expand_ratio=6)
    y3f = inverted_residual_forward(x3, p3, inp=16, oup=24, stride=2, expand_ratio=6,
                                    matmul_dtype=jnp.float32)
    jax.block_until_ready(y3f)
    assert y3f.shape == (2, 24, 28, 28)
    assert jnp.allclose(y3f, r3, rtol=1e-3, atol=1e-3), float(jnp.max(jnp.abs(y3f - r3)))

    # Same layer with the default bf16 MXU operands (f32 accumulation).
    y3b = inverted_residual_forward(x3, p3, inp=16, oup=24, stride=2, expand_ratio=6)
    jax.block_until_ready(y3b)
    assert y3b.shape == (2, 24, 28, 28)
    assert jnp.allclose(y3b, r3, rtol=5e-2, atol=5e-2), float(jnp.max(jnp.abs(y3b - r3)))

    print("KERNEL_OK")
</pallas_src>

<mosaic_0001>
module attributes {stable_mosaic.version = 11 : i64} {
  func.func @_fused_ir_kernel(%arg0: i32, %arg1: i32, %arg2: memref<1x8x24x8xf32, #tpu.memory_space<vmem>>, %arg3: memref<1x1x24x8xf32, #tpu.memory_space<vmem>>, %arg4: memref<1x1x24x8xf32, #tpu.memory_space<vmem>>, %arg5: memref<8x16xf32, #tpu.memory_space<vmem>>, %arg6: memref<1x16xf32, #tpu.memory_space<vmem>>, %arg7: memref<9x16xf32, #tpu.memory_space<vmem>>, %arg8: memref<1x16xf32, #tpu.memory_space<vmem>>, %arg9: memref<16x8xf32, #tpu.memory_space<vmem>>, %arg10: memref<1x8xf32, #tpu.memory_space<vmem>>, %arg11: memref<1x8x16x8xf32, #tpu.memory_space<vmem>>, %arg12: memref<10x24x8xf32, #tpu.memory_space<vmem>>) attributes {dimension_semantics = [#tpu.dimension_semantics<parallel>, #tpu.dimension_semantics<parallel>], iteration_bounds = array<i64: 2, 2>, scalar_prefetch = 0 : i64, scratch_operands = 1 : i64, tpu.core_type = #tpu.core_type<tc>, window_params = [{transform_indices = @transform_0, window_bounds = array<i64: 1, 8, 24, 8>}, {transform_indices = @transform_1, window_bounds = array<i64: 1, 1, 24, 8>}, {transform_indices = @transform_2, window_bounds = array<i64: 1, 1, 24, 8>}, {pipeline_mode = #tpu.pipeline_mode<synchronous>, transform_indices = @transform_3, window_bounds = array<i64: 8, 16>}, {pipeline_mode = #tpu.pipeline_mode<synchronous>, transform_indices = @transform_4, window_bounds = array<i64: 1, 16>}, {pipeline_mode = #tpu.pipeline_mode<synchronous>, transform_indices = @transform_5, window_bounds = array<i64: 9, 16>}, {pipeline_mode = #tpu.pipeline_mode<synchronous>, transform_indices = @transform_6, window_bounds = array<i64: 1, 16>}, {pipeline_mode = #tpu.pipeline_mode<synchronous>, transform_indices = @transform_7, window_bounds = array<i64: 16, 8>}, {pipeline_mode = #tpu.pipeline_mode<synchronous>, transform_indices = @transform_8, window_bounds = array<i64: 1, 8>}, {transform_indices = @transform_9, window_bounds = array<i64: 1, 8, 16, 8>}]} {
    %c0 = arith.constant 0 : index
    %c0_0 = arith.constant 0 : index
    %c0_1 = arith.constant 0 : index
    %c0_2 = arith.constant 0 : index
    %0 = vector.load %arg2[%c0, %c0_0, %c0_1, %c0_2] : memref<1x8x24x8xf32, #tpu.memory_space<vmem>>, vector<1x8x24x8xf32>
    %1 = vector.shape_cast %0 : vector<1x8x24x8xf32> to vector<8x24x8xf32>
    %c0_3 = arith.constant 0 : index
    %c0_4 = arith.constant 0 : index
    %c0_5 = arith.constant 0 : index
    %c0_6 = arith.constant 0 : index
    %2 = vector.load %arg3[%c0_3, %c0_4, %c0_5, %c0_6] : memref<1x1x24x8xf32, #tpu.memory_space<vmem>>, vector<1x1x24x8xf32>
    %3 = vector.shape_cast %2 : vector<1x1x24x8xf32> to vector<1x24x8xf32>
    %c0_7 = arith.constant 0 : index
    %c0_8 = arith.constant 0 : index
    %c0_9 = arith.constant 0 : index
    %4 = vector.load %arg12[%c0_7, %c0_8, %c0_9] : memref<10x24x8xf32, #tpu.memory_space<vmem>>, vector<1x24x8xf32>
    tpu.vector_store %arg12[%c0_7, %c0_8, %c0_9], %3 {strides = array<i32>} : memref<10x24x8xf32, #tpu.memory_space<vmem>>, vector<1x24x8xf32>,
    %c1 = arith.constant 1 : index
    %c0_10 = arith.constant 0 : index
    %c0_11 = arith.constant 0 : index
    %5 = vector.load %arg12[%c1, %c0_10, %c0_11] : memref<10x24x8xf32, #tpu.memory_space<vmem>>, vector<8x24x8xf32>
    tpu.vector_store %arg12[%c1, %c0_10, %c0_11], %1 {strides = array<i32>} : memref<10x24x8xf32, #tpu.memory_space<vmem>>, vector<8x24x8xf32>,
    %c0_12 = arith.constant 0 : index
    %c0_13 = arith.constant 0 : index
    %c0_14 = arith.constant 0 : index
    %c0_15 = arith.constant 0 : index
    %6 = vector.load %arg4[%c0_12, %c0_13, %c0_14, %c0_15] : memref<1x1x24x8xf32, #tpu.memory_space<vmem>>, vector<1x1x24x8xf32>
    %7 = vector.shape_cast %6 : vector<1x1x24x8xf32> to vector<1x24x8xf32>
    %c9 = arith.constant 9 : index
    %c0_16 = arith.constant 0 : index
    %c0_17 = arith.constant 0 : index
    %8 = vector.load %arg12[%c9, %c0_16, %c0_17] : memref<10x24x8xf32, #tpu.memory_space<vmem>>, vector<1x24x8xf32>
    tpu.vector_store %arg12[%c9, %c0_16, %c0_17], %7 {strides = array<i32>} : memref<10x24x8xf32, #tpu.memory_space<vmem>>, vector<1x24x8xf32>,
    %c0_18 = arith.constant 0 : index
    %c0_19 = arith.constant 0 : index
    %c0_20 = arith.constant 0 : index
    %9 = vector.load %arg12[%c0_18, %c0_19, %c0_20] : memref<10x24x8xf32, #tpu.memory_space<vmem>>, vector<10x24x8xf32>
    %10 = vector.shape_cast %9 : vector<10x24x8xf32> to vector<240x8xf32>
    %c0_21 = arith.constant 0 : index
    %c0_22 = arith.constant 0 : index
    %11 = vector.load %arg5[%c0_21, %c0_22] : memref<8x16xf32, #tpu.memory_space<vmem>>, vector<8x16xf32>
    %cst = arith.constant dense<0.000000e+00> : vector<240x16xf32>
    %12 = tpu.matmul %10, %11, %cst {dimension_numbers = #tpu.dot_dimension_numbers<[1], [0], [0], [1], [0, 0, 1, 1], [], []>} : vector<240x8xf32>, vector<8x16xf32>, vector<240x16xf32> -> vector<240x16xf32>
    %c0_23 = arith.constant 0 : index
    %c0_24 = arith.constant 0 : index
    %13 = vector.load %arg6[%c0_23, %c0_24] : memref<1x16xf32, #tpu.memory_space<vmem>>, vector<1x16xf32>
    %14 = vector.broadcast %13 : vector<1x16xf32> to vector<240x16xf32>
    %15 = arith.addf %12, %14 : vector<240x16xf32>
    %cst_25 = arith.constant 0.000000e+00 : f32
    %cst_26 = arith.constant 6.000000e+00 : f32
    %16 = vector.broadcast %cst_25 : f32 to vector<240x16xf32>
    %17 = arith.maximumf %16, %15 : vector<240x16xf32>
    %18 = vector.broadcast %cst_26 : f32 to vector<240x16xf32>
    %19 = arith.minimumf %18, %17 : vector<240x16xf32>
    %20 = vector.shape_cast %19 : vector<240x16xf32> to vector<10x24x16xf32>
    %21 = tpu.iota {dimensions = array<i32: 0>} : vector<10x24x1xi32>
    %22 = tpu.iota {dimensions = array<i32: 1>} : vector<10x24x1xi32>
    %c0_i32 = arith.constant 0 : i32
    %23 = vector.broadcast %c0_i32 : i32 to vector<10x24x1xi32>
    %24 = arith.cmpi ne, %21, %23 : vector<10x24x1xi32>
    %c0_i32_27 = arith.constant 0 : i32
    %25 = arith.cmpi sgt, %arg1, %c0_i32_27 : i32
    %26 = vector.broadcast %25 : i1 to vector<10x24x1xi1>
    %27 = arith.ori %24, %26 : vector<10x24x1xi1>
    %c9_i32 = arith.constant 9 : i32
    %28 = vector.broadcast %c9_i32 : i32 to vector<10x24x1xi32>
    %29 = arith.cmpi ne, %21, %28 : vector<10x24x1xi32>
    %c1_i32 = arith.constant 1 : i32
    %30 = arith.cmpi slt, %arg1, %c1_i32 : i32
    %31 = vector.broadcast %30 : i1 to vector<10x24x1xi1>
    %32 = arith.ori %29, %31 : vector<10x24x1xi1>
    %33 = arith.andi %27, %32 : vector<10x24x1xi1>
    %c1_i32_28 = arith.constant 1 : i32
    %34 = vector.broadcast %c1_i32_28 : i32 to vector<10x24x1xi32>
    %35 = arith.cmpi sge, %22, %34 : vector<10x24x1xi32>
    %c16_i32 = arith.constant 16 : i32
    %36 = vector.broadcast %c16_i32 : i32 to vector<10x24x1xi32>
    %37 = arith.cmpi sle, %22, %36 : vector<10x24x1xi32>
    %38 = arith.andi %35, %37 : vector<10x24x1xi1>
    %39 = arith.andi %33, %38 : vector<10x24x1xi1>
    %cst_29 = arith.constant 0.000000e+00 : f32
    %40 = vector.shape_cast %39 : vector<10x24x1xi1> to vector<10x24x1xi1>
    %41 = vector.broadcast %40 : vector<10x24x1xi1> to vector<10x24x16xi1>
    %42 = vector.broadcast %cst_29 : f32 to vector<10x24x16xf32>
    %43 = arith.select %41, %20, %42 : vector<10x24x16xi1>, vector<10x24x16xf32>
    %c0_30 = arith.constant 0 : index
    %c0_31 = arith.constant 0 : index
    %44 = vector.load %arg7[%c0_30, %c0_31] : memref<9x16xf32, #tpu.memory_space<vmem>>, vector<9x16xf32>
    %cst_32 = arith.constant 0.000000e+00 : f32
    %45 = vector.broadcast %cst_32 : f32 to vector<8x16x16xf32>
    %46 = vector.extract_strided_slice %43 {offsets = [0, 0, 0], sizes = [8, 24, 16], strides = [1, 1, 1]} : vector<10x24x16xf32> to vector<8x24x16xf32>
    %47 = vector.extract_strided_slice %46 {offsets = [0, 0, 0], sizes = [8, 16, 16], strides = [1, 1, 1]} : vector<8x24x16xf32> to vector<8x16x16xf32>
    %48 = vector.extract_strided_slice %44 {offsets = [0, 0], sizes = [1, 16], strides = [1, 1]} : vector<9x16xf32> to vector<1x16xf32>
    %49 = vector.shape_cast %48 : vector<1x16xf32> to vector<16xf32>
    %50 = vector.shape_cast %49 : vector<16xf32> to vector<1x1x16xf32>
    %51 = vector.broadcast %50 : vector<1x1x16xf32> to vector<8x16x16xf32>
    %52 = arith.mulf %47, %51 : vector<8x16x16xf32>
    %53 = arith.addf %45, %52 : vector<8x16x16xf32>
    %54 = vector.extract_strided_slice %46 {offsets = [0, 1, 0], sizes = [8, 16, 16], strides = [1, 1, 1]} : vector<8x24x16xf32> to vector<8x16x16xf32>
    %55 = vector.extract_strided_slice %44 {offsets = [1, 0], sizes = [1, 16], strides = [1, 1]} : vector<9x16xf32> to vector<1x16xf32>
    %56 = vector.shape_cast %55 : vector<1x16xf32> to vector<16xf32>
    %57 = vector.shape_cast %56 : vector<16xf32> to vector<1x1x16xf32>
    %58 = vector.broadcast %57 : vector<1x1x16xf32> to vector<8x16x16xf32>
    %59 = arith.mulf %54, %58 : vector<8x16x16xf32>
    %60 = arith.addf %53, %59 : vector<8x16x16xf32>
    %61 = vector.extract_strided_slice %46 {offsets = [0, 2, 0], sizes = [8, 16, 16], strides = [1, 1, 1]} : vector<8x24x16xf32> to vector<8x16x16xf32>
    %62 = vector.extract_strided_slice %44 {offsets = [2, 0], sizes = [1, 16], strides = [1, 1]} : vector<9x16xf32> to vector<1x16xf32>
    %63 = vector.shape_cast %62 : vector<1x16xf32> to vector<16xf32>
    %64 = vector.shape_cast %63 : vector<16xf32> to vector<1x1x16xf32>
    %65 = vector.broadcast %64 : vector<1x1x16xf32> to vector<8x16x16xf32>
    %66 = arith.mulf %61, %65 : vector<8x16x16xf32>
    %67 = arith.addf %60, %66 : vector<8x16x16xf32>
    %68 = vector.extract_strided_slice %43 {offsets = [1, 0, 0], sizes = [8, 24, 16], strides = [1, 1, 1]} : vector<10x24x16xf32> to vector<8x24x16xf32>
    %69 = vector.extract_strided_slice %68 {offsets = [0, 0, 0], sizes = [8, 16, 16], strides = [1, 1, 1]} : vector<8x24x16xf32> to vector<8x16x16xf32>
    %70 = vector.extract_strided_slice %44 {offsets = [3, 0], sizes = [1, 16], strides = [1, 1]} : vector<9x16xf32> to vector<1x16xf32>
    %71 = vector.shape_cast %70 : vector<1x16xf32> to vector<16xf32>
    %72 = vector.shape_cast %71 : vector<16xf32> to vector<1x1x16xf32>
    %73 = vector.broadcast %72 : vector<1x1x16xf32> to vector<8x16x16xf32>
    %74 = arith.mulf %69, %73 : vector<8x16x16xf32>
    %75 = arith.addf %67, %74 : vector<8x16x16xf32>
    %76 = vector.extract_strided_slice %68 {offsets = [0, 1, 0], sizes = [8, 16, 16], strides = [1, 1, 1]} : vector<8x24x16xf32> to vector<8x16x16xf32>
    %77 = vector.extract_strided_slice %44 {offsets = [4, 0], sizes = [1, 16], strides = [1, 1]} : vector<9x16xf32> to vector<1x16xf32>
    %78 = vector.shape_cast %77 : vector<1x16xf32> to vector<16xf32>
    %79 = vector.shape_cast %78 : vector<16xf32> to vector<1x1x16xf32>
    %80 = vector.broadcast %79 : vector<1x1x16xf32> to vector<8x16x16xf32>
    %81 = arith.mulf %76, %80 : vector<8x16x16xf32>
    %82 = arith.addf %75, %81 : vector<8x16x16xf32>
    %83 = vector.extract_strided_slice %68 {offsets = [0, 2, 0], sizes = [8, 16, 16], strides = [1, 1, 1]} : vector<8x24x16xf32> to vector<8x16x16xf32>
    %84 = vector.extract_strided_slice %44 {offsets = [5, 0], sizes = [1, 16], strides = [1, 1]} : vector<9x16xf32> to vector<1x16xf32>
    %85 = vector.shape_cast %84 : vector<1x16xf32> to vector<16xf32>
    %86 = vector.shape_cast %85 : vector<16xf32> to vector<1x1x16xf32>
    %87 = vector.broadcast %86 : vector<1x1x16xf32> to vector<8x16x16xf32>
    %88 = arith.mulf %83, %87 : vector<8x16x16xf32>
    %89 = arith.addf %82, %88 : vector<8x16x16xf32>
    %90 = vector.extract_strided_slice %43 {offsets = [2, 0, 0], sizes = [8, 24, 16], strides = [1, 1, 1]} : vector<10x24x16xf32> to vector<8x24x16xf32>
    %91 = vector.extract_strided_slice %90 {offsets = [0, 0, 0], sizes = [8, 16, 16], strides = [1, 1, 1]} : vector<8x24x16xf32> to vector<8x16x16xf32>
    %92 = vector.extract_strided_slice %44 {offsets = [6, 0], sizes = [1, 16], strides = [1, 1]} : vector<9x16xf32> to vector<1x16xf32>
    %93 = vector.shape_cast %92 : vector<1x16xf32> to vector<16xf32>
    %94 = vector.shape_cast %93 : vector<16xf32> to vector<1x1x16xf32>
    %95 = vector.broadcast %94 : vector<1x1x16xf32> to vector<8x16x16xf32>
    %96 = arith.mulf %91, %95 : vector<8x16x16xf32>
    %97 = arith.addf %89, %96 : vector<8x16x16xf32>
    %98 = vector.extract_strided_slice %90 {offsets = [0, 1, 0], sizes = [8, 16, 16], strides = [1, 1, 1]} : vector<8x24x16xf32> to vector<8x16x16xf32>
    %99 = vector.extract_strided_slice %44 {offsets = [7, 0], sizes = [1, 16], strides = [1, 1]} : vector<9x16xf32> to vector<1x16xf32>
    %100 = vector.shape_cast %99 : vector<1x16xf32> to vector<16xf32>
    %101 = vector.shape_cast %100 : vector<16xf32> to vector<1x1x16xf32>
    %102 = vector.broadcast %101 : vector<1x1x16xf32> to vector<8x16x16xf32>
    %103 = arith.mulf %98, %102 : vector<8x16x16xf32>
    %104 = arith.addf %97, %103 : vector<8x16x16xf32>
    %105 = vector.extract_strided_slice %90 {offsets = [0, 2, 0], sizes = [8, 16, 16], strides = [1, 1, 1]} : vector<8x24x16xf32> to vector<8x16x16xf32>
    %106 = vector.extract_strided_slice %44 {offsets = [8, 0], sizes = [1, 16], strides = [1, 1]} : vector<9x16xf32> to vector<1x16xf32>
    %107 = vector.shape_cast %106 : vector<1x16xf32> to vector<16xf32>
    %108 = vector.shape_cast %107 : vector<16xf32> to vector<1x1x16xf32>
    %109 = vector.broadcast %108 : vector<1x1x16xf32> to vector<8x16x16xf32>
    %110 = arith.mulf %105, %109 : vector<8x16x16xf32>
    %111 = arith.addf %104, %110 : vector<8x16x16xf32>
    %c0_33 = arith.constant 0 : index
    %c0_34 = arith.constant 0 : index
    %112 = vector.load %arg8[%c0_33, %c0_34] : memref<1x16xf32, #tpu.memory_space<vmem>>, vector<1x16xf32>
    %113 = vector.shape_cast %112 : vector<1x16xf32> to vector<1x1x16xf32>
    %114 = vector.broadcast %113 : vector<1x1x16xf32> to vector<8x16x16xf32>
    %115 = arith.addf %111, %114 : vector<8x16x16xf32>
    %cst_35 = arith.constant 0.000000e+00 : f32
    %cst_36 = arith.constant 6.000000e+00 : f32
    %116 = vector.broadcast %cst_35 : f32 to vector<8x16x16xf32>
    %117 = arith.maximumf %116, %115 : vector<8x16x16xf32>
    %118 = vector.broadcast %cst_36 : f32 to vector<8x16x16xf32>
    %119 = arith.minimumf %118, %117 : vector<8x16x16xf32>
    %120 = vector.shape_cast %119 : vector<8x16x16xf32> to vector<128x16xf32>
    %c0_37 = arith.constant 0 : index
    %c0_38 = arith.constant 0 : index
    %121 = vector.load %arg9[%c0_37, %c0_38] : memref<16x8xf32, #tpu.memory_space<vmem>>, vector<16x8xf32>
    %cst_39 = arith.constant dense<0.000000e+00> : vector<128x8xf32>
    %122 = tpu.matmul %120, %121, %cst_39 {dimension_numbers = #tpu.dot_dimension_numbers<[1], [0], [0], [1], [0, 0, 1, 1], [], []>} : vector<128x16xf32>, vector<16x8xf32>, vector<128x8xf32> -> vector<128x8xf32>
    %c0_40 = arith.constant 0 : index
    %c0_41 = arith.constant 0 : index
    %123 = vector.load %arg10[%c0_40, %c0_41] : memref<1x8xf32, #tpu.memory_space<vmem>>, vector<1x8xf32>
    %124 = vector.broadcast %123 : vector<1x8xf32> to vector<128x8xf32>
    %125 = arith.addf %122, %124 : vector<128x8xf32>
    %126 = vector.extract_strided_slice %1 {offsets = [0, 1, 0], sizes = [8, 16, 8], strides = [1, 1, 1]} : vector<8x24x8xf32> to vector<8x16x8xf32>
    %127 = vector.shape_cast %126 : vector<8x16x8xf32> to vector<128x8xf32>
    %128 = arith.addf %125, %127 : vector<128x8xf32>
    %129 = vector.shape_cast %128 : vector<128x8xf32> to vector<8x16x8xf32>
    %c0_42 = arith.constant 0 : index
    %c0_43 = arith.constant 0 : index
    %c0_44 = arith.constant 0 : index
    %c0_45 = arith.constant 0 : index
    %130 = vector.load %arg11[%c0_42, %c0_43, %c0_44, %c0_45] : memref<1x8x16x8xf32, #tpu.memory_space<vmem>>, vector<1x8x16x8xf32>
    %131 = vector.shape_cast %130 : vector<1x8x16x8xf32> to vector<8x16x8xf32>
    %132 = vector.shape_cast %129 : vector<8x16x8xf32> to vector<1x8x16x8xf32>
    tpu.vector_store %arg11[%c0_42, %c0_43, %c0_44, %c0_45], %132 {strides = array<i32>} : memref<1x8x16x8xf32, #tpu.memory_space<vmem>>, vector<1x8x16x8xf32>,
    return
  }
  func.func @transform_0(%arg0: i32, %arg1: i32) -> (i32, i32, i32, i32) {
    %c0_i32 = arith.constant 0 : i32
    %c0_i32_0 = arith.constant 0 : i32
    %c0_i32_1 = arith.constant 0 : i32
    return %arg0, %arg1, %c0_i32, %c0_i32_0 : i32, i32, i32, i32
  }
  func.func @transform_1(%arg0: i32, %arg1: i32) -> (i32, i32, i32, i32) {
    %c8_i32 = arith.constant 8 : i32
    %0 = arith.muli %arg1, %c8_i32 : i32
    %c1_i32 = arith.constant 1 : i32
    %1 = arith.subi %0, %c1_i32 : i32
    %c0_i32 = arith.constant 0 : i32
    %2 = arith.maxsi %1, %c0_i32 : i32
    %c0_i32_0 = arith.constant 0 : i32
    %c0_i32_1 = arith.constant 0 : i32
    %c0_i32_2 = arith.constant 0 : i32
    return %arg0, %2, %c0_i32_0, %c0_i32_1 : i32, i32, i32, i32
  }
  func.func @transform_2(%arg0: i32, %arg1: i32) -> (i32, i32, i32, i32) {
    %c8_i32 = arith.constant 8 : i32
    %0 = arith.muli %arg1, %c8_i32 : i32
    %c8_i32_0 = arith.constant 8 : i32
    %1 = arith.addi %0, %c8_i32_0 : i32
    %c15_i32 = arith.constant 15 : i32
    %2 = arith.minsi %1, %c15_i32 : i32
    %c0_i32 = arith.constant 0 : i32
    %c0_i32_1 = arith.constant 0 : i32
    %c0_i32_2 = arith.constant 0 : i32
    return %arg0, %2, %c0_i32, %c0_i32_1 : i32, i32, i32, i32
  }
  func.func @transform_3(%arg0: i32, %arg1: i32) -> (i32, i32) {
    %c0_i32 = arith.constant 0 : i32
    %c0_i32_0 = arith.constant 0 : i32
    %c0_i32_1 = arith.constant 0 : i32
    return %c0_i32, %c0_i32_0 : i32, i32
  }
  func.func @transform_4(%arg0: i32, %arg1: i32) -> (i32, i32) {
    %c0_i32 = arith.constant 0 : i32
    %c0_i32_0 = arith.constant 0 : i32
    %c0_i32_1 = arith.constant 0 : i32
    return %c0_i32, %c0_i32_0 : i32, i32
  }
  func.func @transform_5(%arg0: i32, %arg1: i32) -> (i32, i32) {
    %c0_i32 = arith.constant 0 : i32
    %c0_i32_0 = arith.constant 0 : i32
    %c0_i32_1 = arith.constant 0 : i32
    return %c0_i32, %c0_i32_0 : i32, i32
  }
  func.func @transform_6(%arg0: i32, %arg1: i32) -> (i32, i32) {
    %c0_i32 = arith.constant 0 : i32
    %c0_i32_0 = arith.constant 0 : i32
    %c0_i32_1 = arith.constant 0 : i32
    return %c0_i32, %c0_i32_0 : i32, i32
  }
  func.func @transform_7(%arg0: i32, %arg1: i32) -> (i32, i32) {
    %c0_i32 = arith.constant 0 : i32
    %c0_i32_0 = arith.constant 0 : i32
    %c0_i32_1 = arith.constant 0 : i32
    return %c0_i32, %c0_i32_0 : i32, i32
  }
  func.func @transform_8(%arg0: i32, %arg1: i32) -> (i32, i32) {
    %c0_i32 = arith.constant 0 : i32
    %c0_i32_0 = arith.constant 0 : i32
    %c0_i32_1 = arith.constant 0 : i32
    return %c0_i32, %c0_i32_0 : i32, i32
  }
  func.func @transform_9(%arg0: i32, %arg1: i32) -> (i32, i32, i32, i32) {
    %c0_i32 = arith.constant 0 : i32
    %c0_i32_0 = arith.constant 0 : i32
    %c0_i32_1 = arith.constant 0 : i32
    return %arg0, %arg1, %c0_i32, %c0_i32_0 : i32, i32, i32, i32
  }
}

</mosaic_0001>

<llo_original>
// kernel: tpu_custom_call.1
$region0: #{tpu_custom_call.1}
  #allocation0 [shape = 'u32[]', space=smem, size = 0x4, offset = 0x4, fixed_abs, tag = 'smem constant byte address 0x4 - core index']
  #allocation1 [shape = 'u32[144,128]{1,0:T(1,128)}', space=vmem, size = 0x12000, scoped, tag = 'internal scratch']
  #allocation2 [shape = 'f32[10,24,8]{2,1,0:T(8,128)}', space=vmem, size = 0x1e000, scoped, tag = 'scratch operand']
  %s0 = inlined_call_operand.vmem [shape: f32[2,16,24,8], index: 0, kind: input, shape index: {}]
  %s1 = inlined_call_operand.vmem [shape: f32[2,16,24,8], index: 1, kind: input, shape index: {}]
  %s2 = inlined_call_operand.vmem [shape: f32[2,16,24,8], index: 2, kind: input, shape index: {}]
  %s3 = inlined_call_operand.vmem [shape: f32[8,16], index: 3, kind: input, shape index: {}]
  %s4 = inlined_call_operand.vmem [shape: f32[1,16], index: 4, kind: input, shape index: {}]
  %s5 = inlined_call_operand.vmem [shape: f32[9,16], index: 5, kind: input, shape index: {}]
  %s6 = inlined_call_operand.vmem [shape: f32[1,16], index: 6, kind: input, shape index: {}]
  %s7 = inlined_call_operand.vmem [shape: f32[16,8], index: 7, kind: input, shape index: {}]
  %s8 = inlined_call_operand.vmem [shape: f32[1,8], index: 8, kind: input, shape index: {}]
  %s9 = inlined_call_operand.vmem [shape: f32[2,16,16,8], index: 9, kind: output, shape index: {}]
  %s10 = sld [smem:[#allocation0]]
  $region69: #{tpu_custom_call.1} parent=0
    _
  %s12 = ssub.s32 1, %s10
  %s13 = scalar_select 0, %s12, %s10
  loop: start=0, step=1, limit=6
  $region2: #{tpu_custom_call.1} parent=0 // loop_pre_header
    _
  $region3: #{tpu_custom_call.1} parent=0 // loop_header
    %s15 = sphi 0, %s19
    %p16 = scmp.ge.s32.totalorder %s15, 6
    %s22 = sphi 0, %s34
    %s23 = sphi 0, %s30
    %s24 = sphi 0, %s22
    %s25 = sphi 0, %s23
    %s26 = sphi 0, %s24
    %s27 = sphi 0, %s25
    %s39 = sphi 0, %s41
    %s42 = sphi 0, %s39
    %s43 = sphi 0, %s42
    %s59 = sphi 0, %s43
    %s75 = sphi 0, %s77
    %s78 = sphi 0, %s75
    %s79 = sphi 0, %s78
    %s95 = sphi 0, %s79
    %s111 = sphi 0, %s113
    %s114 = sphi 0, %s111
    %s115 = sphi 0, %s114
    %s131 = sphi 0, %s115
    %s135 = sphi 0, %s135
    %s137 = sphi 0, %s135
    %s138 = sphi 0, %s137
    %s152 = sphi 0, %s138
    %s156 = sphi 0, %s156
    %s158 = sphi 0, %s156
    %s159 = sphi 0, %s158
    %s173 = sphi 0, %s159
    %s177 = sphi 0, %s177
    %s179 = sphi 0, %s177
    %s180 = sphi 0, %s179
    %s194 = sphi 0, %s180
    %s198 = sphi 0, %s198
    %s200 = sphi 0, %s198
    %s201 = sphi 0, %s200
    %s215 = sphi 0, %s201
    %s219 = sphi 0, %s219
    %s221 = sphi 0, %s219
    %s222 = sphi 0, %s221
    %s236 = sphi 0, %s222
    %s240 = sphi 0, %s240
    %s242 = sphi 0, %s240
    %s243 = sphi 0, %s242
    %s257 = sphi 0, %s243
    %s265 = sphi 0, %s267
    %s268 = sphi 0, %s265
    %s269 = sphi 0, %s268
    %s285 = sphi 0, %s269
  $region4: #{tpu_custom_call.1} parent=0 // loop_header_branch
    %18 = sbr.rel (%p16) target = $region8
  $region5: #{tpu_custom_call.1} parent=0 // loop_body
    %s20 = ssub.s32 %s15, 1
    %s21 = ssub.s32 %s15, 2
    %s28 = sadd.s32 1, %s23
    %p29 = scmp.ge.s32.totalorder %s28, 2
    %s30 = scalar_select %p29, 0, %s28
    %s31 = sadd.s32 1, %s22
    %s32 = scalar_select %p29, %s31, %s22
    %p33 = scmp.ge.s32.totalorder %s32, 2
    %s34 = scalar_select %p33, 0, %s32
    %s35 = ssub.s32 %s22, %s34
    %s36 = ssub.s32 %s23, %s30
    %s37 = sor.u32 %s35, %s36
    %p38 = scmp.eq.s32.totalorder %s37, 0
    %s40 = sadd.s32 %s39, 1
    %s41 = scalar_select %p38, %s39, %s40
    %p44 = pneg %p38
    %p45 = scmp.eq.s32.totalorder %s15, 3
    %p46 = por %p44, %p45
    %p47 = scmp.ne.s32.totalorder %s39, %s42
    %p48 = scmp.eq.s32.totalorder %s15, 0
    %p49 = por %p47, %p48
    %p50 = scmp.ne.s32.totalorder %s39, %s42
    %p51 = scmp.eq.s32.totalorder %s20, 3
    %p52 = por %p50, %p51
    %p53 = scmp.ne.s32.totalorder %s42, %s43
    %p54 = scmp.eq.s32.totalorder %s20, 0
    %p55 = por %p53, %p54
    %p56 = scmp.ne.s32.totalorder %s42, %s43
    %p57 = scmp.eq.s32.totalorder %s21, 3
    %p58 = por %p56, %p57
    %p60 = scmp.ne.s32.totalorder %s43, %s59
    %p61 = scmp.eq.s32.totalorder %s21, 0
    %p62 = por %p60, %p61
    %s63 = smul.u32 %s23, 8
    %s64 = ssub.s32 %s63, 1
    %p65 = scmp.gt.s32.totalorder %s64, 0
    %s66 = scalar_select %p65, %s64, 0
    %s67 = smul.u32 %s30, 8
    %s68 = ssub.s32 %s67, 1
    %p69 = scmp.gt.s32.totalorder %s68, 0
    %s70 = scalar_select %p69, %s68, 0
    %s71 = ssub.s32 %s22, %s34
    %s72 = ssub.s32 %s66, %s70
    %s73 = sor.u32 %s71, %s72
    %p74 = scmp.eq.s32.totalorder %s73, 0
    %s76 = sadd.s32 %s75, 1
    %s77 = scalar_select %p74, %s75, %s76
    %p80 = pneg %p74
    %p81 = scmp.eq.s32.totalorder %s15, 3
    %p82 = por %p80, %p81
    %p83 = scmp.ne.s32.totalorder %s75, %s78
    %p84 = scmp.eq.s32.totalorder %s15, 0
    %p85 = por %p83, %p84
    %p86 = scmp.ne.s32.totalorder %s75, %s78
    %p87 = scmp.eq.s32.totalorder %s20, 3
    %p88 = por %p86, %p87
    %p89 = scmp.ne.s32.totalorder %s78, %s79
    %p90 = scmp.eq.s32.totalorder %s20, 0
    %p91 = por %p89, %p90
    %p92 = scmp.ne.s32.totalorder %s78, %s79
    %p93 = scmp.eq.s32.totalorder %s21, 3
    %p94 = por %p92, %p93
    %p96 = scmp.ne.s32.totalorder %s79, %s95
    %p97 = scmp.eq.s32.totalorder %s21, 0
    %p98 = por %p96, %p97
    %s99 = smul.u32 %s23, 8
    %s100 = sadd.s32 %s99, 8
    %p101 = scmp.lt.s32.totalorder %s100, 15
    %s102 = scalar_select %p101, %s100, 15
    %s103 = smul.u32 %s30, 8
    %s104 = sadd.s32 %s103, 8
    %p105 = scmp.lt.s32.totalorder %s104, 15
    %s106 = scalar_select %p105, %s104, 15
    %s107 = ssub.s32 %s22, %s34
    %s108 = ssub.s32 %s102, %s106
    %s109 = sor.u32 %s107, %s108
    %p110 = scmp.eq.s32.totalorder %s109, 0
    %s112 = sadd.s32 %s111, 1
    %s113 = scalar_select %p110, %s111, %s112
    %p116 = pneg %p110
    %p117 = scmp.eq.s32.totalorder %s15, 3
    %p118 = por %p116, %p117
    %p119 = scmp.ne.s32.totalorder %s111, %s114
    %p120 = scmp.eq.s32.totalorder %s15, 0
    %p121 = por %p119, %p120
    %p122 = scmp.ne.s32.totalorder %s111, %s114
    %p123 = scmp.eq.s32.totalorder %s20, 3
    %p124 = por %p122, %p123
    %p125 = scmp.ne.s32.totalorder %s114, %s115
    %p126 = scmp.eq.s32.totalorder %s20, 0
    %p127 = por %p125, %p126
    %p128 = scmp.ne.s32.totalorder %s114, %s115
    %p129 = scmp.eq.s32.totalorder %s21, 3
    %p130 = por %p128, %p129
    %p132 = scmp.ne.s32.totalorder %s115, %s131
    %p133 = scmp.eq.s32.totalorder %s21, 0
    %p134 = por %p132, %p133
    %s136 = sadd.s32 %s135, 1
    %p139 = scmp.eq.s32.totalorder %s15, 3
    %p140 = scmp.ne.s32.totalorder %s135, %s137
    %p141 = scmp.eq.s32.totalorder %s15, 0
    %p142 = por %p140, %p141
    %p143 = scmp.ne.s32.totalorder %s135, %s137
    %p144 = scmp.eq.s32.totalorder %s20, 3
    %p145 = por %p143, %p144
    %p146 = scmp.ne.s32.totalorder %s137, %s138
    %p147 = scmp.eq.s32.totalorder %s20, 0
    %p148 = por %p146, %p147
    %p149 = scmp.ne.s32.totalorder %s137, %s138
    %p150 = scmp.eq.s32.totalorder %s21, 3
    %p151 = por %p149, %p150
    %p153 = scmp.ne.s32.totalorder %s138, %s152
    %p154 = scmp.eq.s32.totalorder %s21, 0
    %p155 = por %p153, %p154
    %s157 = sadd.s32 %s156, 1
    %p160 = scmp.eq.s32.totalorder %s15, 3
    %p161 = scmp.ne.s32.totalorder %s156, %s158
    %p162 = scmp.eq.s32.totalorder %s15, 0
    %p163 = por %p161, %p162
    %p164 = scmp.ne.s32.totalorder %s156, %s158
    %p165 = scmp.eq.s32.totalorder %s20, 3
    %p166 = por %p164, %p165
    %p167 = scmp.ne.s32.totalorder %s158, %s159
    %p168 = scmp.eq.s32.totalorder %s20, 0
    %p169 = por %p167, %p168
    %p170 = scmp.ne.s32.totalorder %s158, %s159
    %p171 = scmp.eq.s32.totalorder %s21, 3
    %p172 = por %p170, %p171
    %p174 = scmp.ne.s32.totalorder %s159, %s173
    %p175 = scmp.eq.s32.totalorder %s21, 0
    %p176 = por %p174, %p175
    %s178 = sadd.s32 %s177, 1
    %p181 = scmp.eq.s32.totalorder %s15, 3
    %p182 = scmp.ne.s32.totalorder %s177, %s179
    %p183 = scmp.eq.s32.totalorder %s15, 0
    %p184 = por %p182, %p183
    %p185 = scmp.ne.s32.totalorder %s177, %s179
    %p186 = scmp.eq.s32.totalorder %s20, 3
    %p187 = por %p185, %p186
    %p188 = scmp.ne.s32.totalorder %s179, %s180
    %p189 = scmp.eq.s32.totalorder %s20, 0
    %p190 = por %p188, %p189
    %p191 = scmp.ne.s32.totalorder %s179, %s180
    %p192 = scmp.eq.s32.totalorder %s21, 3
    %p193 = por %p191, %p192
    %p195 = scmp.ne.s32.totalorder %s180, %s194
    %p196 = scmp.eq.s32.totalorder %s21, 0
    %p197 = por %p195, %p196
    %s199 = sadd.s32 %s198, 1
    %p202 = scmp.eq.s32.totalorder %s15, 3
    %p203 = scmp.ne.s32.totalorder %s198, %s200
    %p204 = scmp.eq.s32.totalorder %s15, 0
    %p205 = por %p203, %p204
    %p206 = scmp.ne.s32.totalorder %s198, %s200
    %p207 = scmp.eq.s32.totalorder %s20, 3
    %p208 = por %p206, %p207
    %p209 = scmp.ne.s32.totalorder %s200, %s201
    %p210 = scmp.eq.s32.totalorder %s20, 0
    %p211 = por %p209, %p210
    %p212 = scmp.ne.s32.totalorder %s200, %s201
    %p213 = scmp.eq.s32.totalorder %s21, 3
    %p214 = por %p212, %p213
    %p216 = scmp.ne.s32.totalorder %s201, %s215
    %p217 = scmp.eq.s32.totalorder %s21, 0
    %p218 = por %p216, %p217
    %s220 = sadd.s32 %s219, 1
    %p223 = scmp.eq.s32.totalorder %s15, 3
    %p224 = scmp.ne.s32.totalorder %s219, %s221
    %p225 = scmp.eq.s32.totalorder %s15, 0
    %p226 = por %p224, %p225
    %p227 = scmp.ne.s32.totalorder %s219, %s221
    %p228 = scmp.eq.s32.totalorder %s20, 3
    %p229 = por %p227, %p228
    %p230 = scmp.ne.s32.totalorder %s221, %s222
    %p231 = scmp.eq.s32.totalorder %s20, 0
    %p232 = por %p230, %p231
    %p233 = scmp.ne.s32.totalorder %s221, %s222
    %p234 = scmp.eq.s32.totalorder %s21, 3
    %p235 = por %p233, %p234
    %p237 = scmp.ne.s32.totalorder %s222, %s236
    %p238 = scmp.eq.s32.totalorder %s21, 0
    %p239 = por %p237, %p238
    %s241 = sadd.s32 %s240, 1
    %p244 = scmp.eq.s32.totalorder %s15, 3
    %p245 = scmp.ne.s32.totalorder %s240, %s242
    %p246 = scmp.eq.s32.totalorder %s15, 0
    %p247 = por %p245, %p246
    %p248 = scmp.ne.s32.totalorder %s240, %s242
    %p249 = scmp.eq.s32.totalorder %s20, 3
    %p250 = por %p248, %p249
    %p251 = scmp.ne.s32.totalorder %s242, %s243
    %p252 = scmp.eq.s32.totalorder %s20, 0
    %p253 = por %p251, %p252
    %p254 = scmp.ne.s32.totalorder %s242, %s243
    %p255 = scmp.eq.s32.totalorder %s21, 3
    %p256 = por %p254, %p255
    %p258 = scmp.ne.s32.totalorder %s243, %s257
    %p259 = scmp.eq.s32.totalorder %s21, 0
    %p260 = por %p258, %p259
    %s261 = ssub.s32 %s22, %s34
    %s262 = ssub.s32 %s23, %s30
    %s263 = sor.u32 %s261, %s262
    %p264 = scmp.eq.s32.totalorder %s263, 0
    %s266 = sadd.s32 %s265, 1
    %s267 = scalar_select %p264, %s265, %s266
    %p270 = pneg %p264
    %p271 = scmp.eq.s32.totalorder %s15, 3
    %p272 = por %p270, %p271
    %p273 = scmp.ne.s32.totalorder %s265, %s268
    %p274 = scmp.eq.s32.totalorder %s15, 0
    %p275 = por %p273, %p274
    %p276 = scmp.ne.s32.totalorder %s265, %s268
    %p277 = scmp.eq.s32.totalorder %s20, 3
    %p278 = por %p276, %p277
    %p279 = scmp.ne.s32.totalorder %s268, %s269
    %p280 = scmp.eq.s32.totalorder %s20, 0
    %p281 = por %p279, %p280
    %p282 = scmp.ne.s32.totalorder %s268, %s269
    %p283 = scmp.eq.s32.totalorder %s21, 3
    %p284 = por %p282, %p283
    %p286 = scmp.ne.s32.totalorder %s269, %s285
    %p287 = scmp.eq.s32.totalorder %s21, 0
    %p288 = por %p286, %p287
    %p289 = scmp.le.s32.totalorder 1, %s15
    %p290 = scmp.lt.s32.totalorder %s15, 5
    %p291 = pnand %p289, %p290
    %p292 = pneg %p291
    // Predicated region
    $region9: #{tpu_custom_call.1} parent=5 // pred_check
      _
    $region10: #{tpu_custom_call.1} parent=5 // pred_check_branch
      %294 = sbr.rel (%p291) target = $region12
    $region11: #{tpu_custom_call.1} parent=5 // pred_region
      %s295 = ssub.s32 %s15, 1
      // Predicated region
      $region13: #{tpu_custom_call.1} parent=11 // pred_check
        %p296 = pneg %p148
      $region14: #{tpu_custom_call.1} parent=11 // pred_check_branch
        %298 = sbr.rel (%p296) target = $region16
      $region15: #{tpu_custom_call.1} parent=11 // pred_region
        _
      $region16: #{tpu_custom_call.1} parent=11 // pred_fallthru
        _
      // Predicated region
      $region17: #{tpu_custom_call.1} parent=11 // pred_check
        %p299 = pneg %p169
      $region18: #{tpu_custom_call.1} parent=11 // pred_check_branch
        %301 = sbr.rel (%p299) target = $region20
      $region19: #{tpu_custom_call.1} parent=11 // pred_region
        _
      $region20: #{tpu_custom_call.1} parent=11 // pred_fallthru
        _
      // Predicated region
      $region21: #{tpu_custom_call.1} parent=11 // pred_check
        %p302 = pneg %p190
      $region22: #{tpu_custom_call.1} parent=11 // pred_check_branch
        %304 = sbr.rel (%p302) target = $region24
      $region23: #{tpu_custom_call.1} parent=11 // pred_region
        _
      $region24: #{tpu_custom_call.1} parent=11 // pred_fallthru
        _
      // Predicated region
      $region25: #{tpu_custom_call.1} parent=11 // pred_check
        %p305 = pneg %p211
      $region26: #{tpu_custom_call.1} parent=11 // pred_check_branch
        %307 = sbr.rel (%p305) target = $region28
      $region27: #{tpu_custom_call.1} parent=11 // pred_region
        _
      $region28: #{tpu_custom_call.1} parent=11 // pred_fallthru
        _
      // Predicated region
      $region29: #{tpu_custom_call.1} parent=11 // pred_check
        %p308 = pneg %p232
      $region30: #{tpu_custom_call.1} parent=11 // pred_check_branch
        %310 = sbr.rel (%p308) target = $region32
      $region31: #{tpu_custom_call.1} parent=11 // pred_region
        _
      $region32: #{tpu_custom_call.1} parent=11 // pred_fallthru
        _
      // Predicated region
      $region33: #{tpu_custom_call.1} parent=11 // pred_check
        %p311 = pneg %p253
      $region34: #{tpu_custom_call.1} parent=11 // pred_check_branch
        %313 = sbr.rel (%p311) target = $region36
      $region35: #{tpu_custom_call.1} parent=11 // pred_region
        _
      $region36: #{tpu_custom_call.1} parent=11 // pred_fallthru
        _
    $region12: #{tpu_custom_call.1} parent=5 // pred_fallthru
      _
    %p314 = scmp.lt.s32.totalorder %s15, 4
    // Predicated region
    $region37: #{tpu_custom_call.1} parent=5 // pred_check
      %p315 = pneg %p314
    $region38: #{tpu_custom_call.1} parent=5 // pred_check_branch
      %317 = sbr.rel (%p315) target = $region40
    $region39: #{tpu_custom_call.1} parent=5 // pred_region
      // Predicated region
      $region41: #{tpu_custom_call.1} parent=39 // pred_check
        %p318 = pneg %p49
      $region42: #{tpu_custom_call.1} parent=39 // pred_check_branch
        %320 = sbr.rel (%p318) target = $region44
      $region43: #{tpu_custom_call.1} parent=39 // pred_region
        %s321 = smul.u32 8, %s23
        %p322 = scmp.lt.s32.totalorder %s22, 1
        %s323 = scalar_select %p322, %s22, 1
        %p324 = scmp.lt.s32.totalorder %s321, 15
        %s325 = scalar_select %p324, %s321, 15
        %s326 = smul.addr %s325, 3
        %s327 = smul.addr %s323, 48
        %s328 = sadd.s32 %s326, %s327
        %s329 = smul.addr %s328, 8
        %s330 = scalar_lea.vmem %s0, %s329
        %s331 = smul.u32 8, %s23
      $region44: #{tpu_custom_call.1} parent=39 // pred_fallthru
        _
      // Predicated region
      $region45: #{tpu_custom_call.1} parent=39 // pred_check
        %p332 = pneg %p85
      $region46: #{tpu_custom_call.1} parent=39 // pred_check_branch
        %334 = sbr.rel (%p332) target = $region48
      $region47: #{tpu_custom_call.1} parent=39 // pred_region
        %s335 = smul.u32 %s23, 8
        %s336 = ssub.s32 %s335, 1
        %p337 = scmp.gt.s32.totalorder %s336, 0
        %s338 = scalar_select %p337, %s336, 0
        %p339 = scmp.lt.s32.totalorder %s22, 1
        %s340 = scalar_select %p339, %s22, 1
        %p341 = scmp.lt.s32.totalorder %s338, 15
        %s342 = scalar_select %p341, %s338, 15
        %s343 = smul.addr %s342, 3
        %s344 = smul.addr %s340, 48
        %s345 = sadd.s32 %s343, %s344
        %s346 = smul.addr %s345, 8
        %s347 = scalar_lea.vmem %s1, %s346
        %s348 = smul.u32 %s23, 8
        %s349 = ssub.s32 %s348, 1
        %p350 = scmp.gt.s32.totalorder %s349, 0
        %s351 = scalar_select %p350, %s349, 0
      $region48: #{tpu_custom_call.1} parent=39 // pred_fallthru
        _
      // Predicated region
      $region49: #{tpu_custom_call.1} parent=39 // pred_check
        %p352 = pneg %p121
      $region50: #{tpu_custom_call.1} parent=39 // pred_check_branch
        %354 = sbr.rel (%p352) target = $region52
      $region51: #{tpu_custom_call.1} parent=39 // pred_region
        %s355 = smul.u32 %s23, 8
        %s356 = sadd.s32 %s355, 8
        %p357 = scmp.lt.s32.totalorder %s356, 15
        %s358 = scalar_select %p357, %s356, 15
        %p359 = scmp.lt.s32.totalorder %s22, 1
        %s360 = scalar_select %p359, %s22, 1
        %p361 = scmp.lt.s32.totalorder %s358, 15
        %s362 = scalar_select %p361, %s358, 15
        %s363 = smul.addr %s362, 3
        %s364 = smul.addr %s360, 48
        %s365 = sadd.s32 %s363, %s364
        %s366 = smul.addr %s365, 8
        %s367 = scalar_lea.vmem %s2, %s366
        %s368 = smul.u32 %s23, 8
        %s369 = sadd.s32 %s368, 8
        %p370 = scmp.lt.s32.totalorder %s369, 15
        %s371 = scalar_select %p370, %s369, 15
      $region52: #{tpu_custom_call.1} parent=39 // pred_fallthru
        _
    $region40: #{tpu_custom_call.1} parent=5 // pred_fallthru
      _
    %p372 = scmp.le.s32.totalorder 1, %s15
    %p373 = scmp.lt.s32.totalorder %s15, 5
    %p374 = pnand %p372, %p373
    %p375 = pneg %p374
    // Predicated region
    $region53: #{tpu_custom_call.1} parent=5 // pred_check
      _
    $region54: #{tpu_custom_call.1} parent=5 // pred_check_branch
      %377 = sbr.rel (%p374) target = $region56
    $region55: #{tpu_custom_call.1} parent=5 // pred_region
      %s378 = ssub.s32 %s15, 1
      %s379 = smul.u32 8, %s25
      %p380 = scmp.lt.s32.totalorder %s24, 1
      %s381 = scalar_select %p380, %s24, 1
      %p382 = scmp.lt.s32.totalorder %s379, 15
      %s383 = scalar_select %p382, %s379, 15
      %s384 = smul.addr %s383, 3
      %s385 = smul.addr %s381, 48
      %s386 = sadd.s32 %s384, %s385
      %s387 = smul.addr %s386, 8
      %s388 = scalar_lea.vmem %s0, %s387
      %p389 = pneg %p55
      %p390 = pneg %p52
      %s391 = smul.u32 %s25, 8
      %s392 = ssub.s32 %s391, 1
      %p393 = scmp.gt.s32.totalorder %s392, 0
      %s394 = scalar_select %p393, %s392, 0
      %p395 = scmp.lt.s32.totalorder %s24, 1
      %s396 = scalar_select %p395, %s24, 1
      %p397 = scmp.lt.s32.totalorder %s394, 15
      %s398 = scalar_select %p397, %s394, 15
      %s399 = smul.addr %s398, 3
      %s400 = smul.addr %s396, 48
      %s401 = sadd.s32 %s399, %s400
      %s402 = smul.addr %s401, 8
      %s403 = scalar_lea.vmem %s1, %s402
      %p404 = pneg %p91
      %p405 = pneg %p88
      %s406 = smul.u32 %s25, 8
      %s407 = sadd.s32 %s406, 8
      %p408 = scmp.lt.s32.totalorder %s407, 15
      %s409 = scalar_select %p408, %s407, 15
      %p410 = scmp.lt.s32.totalorder %s24, 1
      %s411 = scalar_select %p410, %s24, 1
      %p412 = scmp.lt.s32.totalorder %s409, 15
      %s413 = scalar_select %p412, %s409, 15
      %s414 = smul.addr %s413, 3
      %s415 = smul.addr %s411, 48
      %s416 = sadd.s32 %s414, %s415
      %s417 = smul.addr %s416, 8
      %s418 = scalar_lea.vmem %s2, %s417
      %p419 = pneg %p127
      %p420 = pneg %p124
      %p421 = pneg %p148
      %p422 = pneg %p145
      %p423 = pneg %p169
      %p424 = pneg %p166
      %p425 = pneg %p190
      %p426 = pneg %p187
      %p427 = pneg %p211
      %p428 = pneg %p208
      %p429 = pneg %p232
      %p430 = pneg %p229
      %p431 = pneg %p253
      %p432 = pneg %p250
      %p433 = pneg %p281
      %p434 = pneg %p278
      %s435 = smul.u32 8, %s25
      %p436 = scmp.lt.s32.totalorder %s24, 1
      %s437 = scalar_select %p436, %s24, 1
      %p438 = scmp.lt.s32.totalorder %s435, 15
      %s439 = scalar_select %p438, %s435, 15
      %s440 = smul.addr %s439, 2
      %s441 = smul.addr %s437, 32
      %s442 = sadd.s32 %s440, %s441
      %s443 = smul.addr %s442, 8
      %s444 = scalar_lea.vmem %s9, %s443
      %s445 = smul.u32 8, %s25
      %p446 = scmp.lt.s32.totalorder %s24, 1
      %s447 = scalar_select %p446, %s24, 1
      %p448 = scmp.lt.s32.totalorder %s445, 15
      %s449 = scalar_select %p448, %s445, 15
      %s450 = smul.addr %s449, 3
      %s451 = smul.addr %s447, 48
      %s452 = sadd.s32 %s450, %s451
      %s453 = smul.addr %s452, 8
      %s454 = scalar_lea.vmem %s0, %s453
      %s455 = smul.u32 8, %s25
      %s456 = smul.u32 %s25, 8
      %s457 = ssub.s32 %s456, 1
      %p458 = scmp.gt.s32.totalorder %s457, 0
      %s459 = scalar_select %p458, %s457, 0
      %p460 = scmp.lt.s32.totalorder %s24, 1
      %s461 = scalar_select %p460, %s24, 1
      %p462 = scmp.lt.s32.totalorder %s459, 15
      %s463 = scalar_select %p462, %s459, 15
      %s464 = smul.addr %s463, 3
      %s465 = smul.addr %s461, 48
      %s466 = sadd.s32 %s464, %s465
      %s467 = smul.addr %s466, 8
      %s468 = scalar_lea.vmem %s1, %s467
      %s469 = smul.u32 %s25, 8
      %s470 = ssub.s32 %s469, 1
      %p471 = scmp.gt.s32.totalorder %s470, 0
      %s472 = scalar_select %p471, %s470, 0
      %s473 = smul.u32 %s25, 8
      %s474 = sadd.s32 %s473, 8
      %p475 = scmp.lt.s32.totalorder %s474, 15
      %s476 = scalar_select %p475, %s474, 15
      %p477 = scmp.lt.s32.totalorder %s24, 1
      %s478 = scalar_select %p477, %s24, 1
      %p479 = scmp.lt.s32.totalorder %s476, 15
      %s480 = scalar_select %p479, %s476, 15
      %s481 = smul.addr %s480, 3
      %s482 = smul.addr %s478, 48
      %s483 = sadd.s32 %s481, %s482
      %s484 = smul.addr %s483, 8
      %s485 = scalar_lea.vmem %s2, %s484
      %s486 = smul.u32 %s25, 8
      %s487 = sadd.s32 %s486, 8
      %p488 = scmp.lt.s32.totalorder %s487, 15
      %s489 = scalar_select %p488, %s487, 15
      %s490 = smul.u32 8, %s25
      %p491 = scmp.lt.s32.totalorder %s24, 1
      %s492 = scalar_select %p491, %s24, 1
      %p493 = scmp.lt.s32.totalorder %s490, 15
      %s494 = scalar_select %p493, %s490, 15
      %s495 = smul.addr %s494, 2
      %s496 = smul.addr %s492, 32
      %s497 = sadd.s32 %s495, %s496
      %s498 = smul.addr %s497, 8
      %s499 = scalar_lea.vmem %s9, %s498
      %s500 = smul.u32 8, %s25
      %v501 = vld [vmem:[%s454] sm:$0xff]
      %v502 = vld [vmem:[%s454 + $0x8] sm:$0xff]
      %v503 = vld [vmem:[%s454 + $0x10] sm:$0xff]
      %v504 = vld [vmem:[%s454 + $0x18] sm:$0xff]
      %v505 = vld [vmem:[%s454 + $0x20] sm:$0xff]
      %v506 = vld [vmem:[%s454 + $0x28] sm:$0xff]
      %v507 = vld [vmem:[%s454 + $0x30] sm:$0xff]
      %v508 = vld [vmem:[%s454 + $0x38] sm:$0xff]
      %v509 = vld [vmem:[%s454 + $0x40] sm:$0xff]
      %v510 = vld [vmem:[%s454 + $0x48] sm:$0xff]
      %v511 = vld [vmem:[%s454 + $0x50] sm:$0xff]
      %v512 = vld [vmem:[%s454 + $0x58] sm:$0xff]
      %v513 = vld [vmem:[%s454 + $0x60] sm:$0xff]
      %v514 = vld [vmem:[%s454 + $0x68] sm:$0xff]
      %v515 = vld [vmem:[%s454 + $0x70] sm:$0xff]
      %v516 = vld [vmem:[%s454 + $0x78] sm:$0xff]
      %v517 = vld [vmem:[%s454 + $0x80] sm:$0xff]
      %v518 = vld [vmem:[%s454 + $0x88] sm:$0xff]
      %v519 = vld [vmem:[%s454 + $0x90] sm:$0xff]
      %v520 = vld [vmem:[%s454 + $0x98] sm:$0xff]
      %v521 = vld [vmem:[%s454 + $0xa0] sm:$0xff]
      %v522 = vld [vmem:[%s454 + $0xa8] sm:$0xff]
      %v523 = vld [vmem:[%s454 + $0xb0] sm:$0xff]
      %v524 = vld [vmem:[%s454 + $0xb8] sm:$0xff]
      %v525 = vld [vmem:[%s468] sm:$0xff]
      %v526 = vld [vmem:[%s468 + $0x8] sm:$0xff]
      %v527 = vld [vmem:[%s468 + $0x10] sm:$0xff]
      %vm528 = vcmask 64512
      %529 = vst.msk [vmem:[#allocation2] sm:$0xff] %vm528, %v525
      %530 = vst.msk [vmem:[#allocation2 + $0x8] sm:$0xff] %vm528, %v526
      %531 = vst.msk [vmem:[#allocation2 + $0x10] sm:$0xff] %vm528, %v527
      %s532 = scalar_lea.vmem [#allocation2], 24
      %533 = vst.msk [vmem:[%s532] sm:$0xff] %vm528, %v501
      %534 = vst.msk [vmem:[%s532 + $0x8] sm:$0xff] %vm528, %v502
      %535 = vst.msk [vmem:[%s532 + $0x10] sm:$0xff] %vm528, %v503
      %536 = vst.msk [vmem:[%s532 + $0x18] sm:$0xff] %vm528, %v504
      %537 = vst.msk [vmem:[%s532 + $0x20] sm:$0xff] %vm528, %v505
      %538 = vst.msk [vmem:[%s532 + $0x28] sm:$0xff] %vm528, %v506
      %539 = vst.msk [vmem:[%s532 + $0x30] sm:$0xff] %vm528, %v507
      %540 = vst.msk [vmem:[%s532 + $0x38] sm:$0xff] %vm528, %v508
      %541 = vst.msk [vmem:[%s532 + $0x40] sm:$0xff] %vm528, %v509
      %542 = vst.msk [vmem:[%s532 + $0x48] sm:$0xff] %vm528, %v510
      %543 = vst.msk [vmem:[%s532 + $0x50] sm:$0xff] %vm528, %v511
      %544 = vst.msk [vmem:[%s532 + $0x58] sm:$0xff] %vm528, %v512
      %545 = vst.msk [vmem:[%s532 + $0x60] sm:$0xff] %vm528, %v513
      %546 = vst.msk [vmem:[%s532 + $0x68] sm:$0xff] %vm528, %v514
      %547 = vst.msk [vmem:[%s532 + $0x70] sm:$0xff] %vm528, %v515
      %548 = vst.msk [vmem:[%s532 + $0x78] sm:$0xff] %vm528, %v516
      %549 = vst.msk [vmem:[%s532 + $0x80] sm:$0xff] %vm528, %v517
      %550 = vst.msk [vmem:[%s532 + $0x88] sm:$0xff] %vm528, %v518
      %551 = vst.msk [vmem:[%s532 + $0x90] sm:$0xff] %vm528, %v519
      %552 = vst.msk [vmem:[%s532 + $0x98] sm:$0xff] %vm528, %v520
      %553 = vst.msk [vmem:[%s532 + $0xa0] sm:$0xff] %vm528, %v521
      %554 = vst.msk [vmem:[%s532 + $0xa8] sm:$0xff] %vm528, %v522
      %555 = vst.msk [vmem:[%s532 + $0xb0] sm:$0xff] %vm528, %v523
      %556 = vst.msk [vmem:[%s532 + $0xb8] sm:$0xff] %vm528, %v524
      %v557 = vld [vmem:[%s485] sm:$0xff]
      %v558 = vld [vmem:[%s485 + $0x8] sm:$0xff]
      %v559 = vld [vmem:[%s485 + $0x10] sm:$0xff]
      %s560 = scalar_lea.vmem [#allocation2], 216
      %561 = vst.msk [vmem:[%s560] sm:$0xff] %vm528, %v557
      %562 = vst.msk [vmem:[%s560 + $0x8] sm:$0xff] %vm528, %v558
      %563 = vst.msk [vmem:[%s560 + $0x10] sm:$0xff] %vm528, %v559
      %v564 = vld [vmem:[#allocation2] sm:$0xff]
      %v565 = vld [vmem:[#allocation2 + $0x8] sm:$0xff]
      %v566 = vld [vmem:[#allocation2 + $0x10] sm:$0xff]
      %v567 = vld [vmem:[#allocation2 + $0x18] sm:$0xff]
      %v568 = vld [vmem:[#allocation2 + $0x20] sm:$0xff]
      %v569 = vld [vmem:[#allocation2 + $0x28] sm:$0xff]
      %v570 = vld [vmem:[#allocation2 + $0x30] sm:$0xff]
      %v571 = vld [vmem:[#allocation2 + $0x38] sm:$0xff]
      %v572 = vld [vmem:[#allocation2 + $0x40] sm:$0xff]
      %v573 = vld [vmem:[#allocation2 + $0x48] sm:$0xff]
      %v574 = vld [vmem:[#allocation2 + $0x50] sm:$0xff]
      %v575 = vld [vmem:[#allocation2 + $0x58] sm:$0xff]
      %v576 = vld [vmem:[#allocation2 + $0x60] sm:$0xff]
      %v577 = vld [vmem:[#allocation2 + $0x68] sm:$0xff]
      %v578 = vld [vmem:[#allocation2 + $0x70] sm:$0xff]
      %v579 = vld [vmem:[#allocation2 + $0x78] sm:$0xff]
      %v580 = vld [vmem:[#allocation2 + $0x80] sm:$0xff]
      %v581 = vld [vmem:[#allocation2 + $0x88] sm:$0xff]
      %v582 = vld [vmem:[#allocation2 + $0x90] sm:$0xff]
      %v583 = vld [vmem:[#allocation2 + $0x98] sm:$0xff]
      %v584 = vld [vmem:[#allocation2 + $0xa0] sm:$0xff]
      %v585 = vld [vmem:[#allocation2 + $0xa8] sm:$0xff]
      %v586 = vld [vmem:[#allocation2 + $0xb0] sm:$0xff]
      %v587 = vld [vmem:[#allocation2 + $0xb8] sm:$0xff]
      %v588 = vld [vmem:[#allocation2 + $0xc0] sm:$0xff]
      %v589 = vld [vmem:[#allocation2 + $0xc8] sm:$0xff]
      %v590 = vld [vmem:[#allocation2 + $0xd0] sm:$0xff]
      %v591 = vld [vmem:[#allocation2 + $0xd8] sm:$0xff]
      %v592 = vld [vmem:[#allocation2 + $0xe0] sm:$0xff]
      %v593 = vld [vmem:[#allocation2 + $0xe8] sm:$0xff]
      %v594 = vld [vmem:[%s3] sm:$0xff]
      %v595 = vld [vmem:[%s4] sm:$0x1]
      %v597 = vlaneseq
      %v598 = vshrl.u32 %v597, 7
      %v599 = vsub.s32 0, %v598
      %v600 = vrot.slane %v595, %v599
      %v603 = vsel %vm528, %v564, 0
      %v606 = vsel %vm528, %v565, 0
      %v609 = vsel %vm528, %v566, 0
      %v612 = vsel %vm528, %v567, 0
      %v615 = vsel %vm528, %v568, 0
      %v618 = vsel %vm528, %v569, 0
      %v621 = vsel %vm528, %v570, 0
      %v624 = vsel %vm528, %v571, 0
      %v627 = vsel %vm528, %v572, 0
      %v630 = vsel %vm528, %v573, 0
      %v633 = vsel %vm528, %v574, 0
      %v636 = vsel %vm528, %v575, 0
      %v639 = vsel %vm528, %v576, 0
      %v642 = vsel %vm528, %v577, 0
      %v645 = vsel %vm528, %v578, 0
      %v648 = vsel %vm528, %v579, 0
      %v651 = vsel %vm528, %v580, 0
      %v654 = vsel %vm528, %v581, 0
      %v657 = vsel %vm528, %v582, 0
      %v660 = vsel %vm528, %v583, 0
      %v663 = vsel %vm528, %v584, 0
      %v666 = vsel %vm528, %v585, 0
      %v669 = vsel %vm528, %v586, 0
      %v672 = vsel %vm528, %v587, 0
      %v675 = vsel %vm528, %v588, 0
      %v678 = vsel %vm528, %v589, 0
      %v681 = vsel %vm528, %v590, 0
      %v684 = vsel %vm528, %v591, 0
      %v687 = vsel %vm528, %v592, 0
      %v690 = vsel %vm528, %v593, 0
      %692 = vmatprep.subr.mxu0 0.0
      %693 = vmatpush1.msra.mxu0 %v594
      %694 = vmatprep.subr.mxu0 0.0
      %695 = vmatpush1.msra.mxu0 0.0
      %696 = vmatprep.subr.mxu0 0.0
      %697 = vmatpush1.msra.mxu0 0.0
      %698 = vmatprep.subr.mxu0 0.0
      %699 = vmatpush1.msra.mxu0 0.0
      %700 = vmatprep.subr.mxu0 0.0
      %701 = vmatpush1.msra.mxu0 0.0
      %702 = vmatprep.subr.mxu0 0.0
      %703 = vmatpush1.msra.mxu0 0.0
      %704 = vmatprep.subr.mxu0 0.0
      %705 = vmatpush1.msra.mxu0 0.0
      %706 = vmatprep.subr.mxu0 0.0
      %707 = vmatpush1.msra.mxu0 0.0
      %708 = vmatprep.subr.mxu0 0.0
      %709 = vmatpush1.msra.mxu0 0.0
      %710 = vmatprep.subr.mxu0 0.0
      %711 = vmatpush1.msra.mxu0 0.0
      %712 = vmatprep.subr.mxu0 0.0
      %713 = vmatpush1.msra.mxu0 0.0
      %714 = vmatprep.subr.mxu0 0.0
      %715 = vmatpush1.msra.mxu0 0.0
      %716 = vmatprep.subr.mxu0 0.0
      %717 = vmatpush1.msra.mxu0 0.0
      %718 = vmatprep.subr.mxu0 0.0
      %719 = vmatpush1.msra.mxu0 0.0
      %720 = vmatprep.subr.mxu0 0.0
      %721 = vmatpush1.msra.mxu0 0.0
      %722 = vmatprep.subr.mxu0 0.0
      %723 = vmatpush1.msra.mxu0 0.0
      %724 = vmatprep.subr.mxu0 0.0
      %725 = vmatpush1.msra.mxu0 0.0
      %726 = vmatprep.subr.mxu0 0.0
      %727 = vmatpush1.msra.mxu0 0.0
      %728 = vmatprep.subr.mxu0 0.0
      %729 = vmatpush1.msra.mxu0 0.0
      %730 = vmatprep.subr.mxu0 0.0
      %731 = vmatpush1.msra.mxu0 0.0
      %732 = vmatprep.subr.mxu0 0.0
      %733 = vmatpush1.msra.mxu0 0.0
      %734 = vmatprep.subr.mxu0 0.0
      %735 = vmatpush1.msra.mxu0 0.0
      %736 = vmatprep.subr.mxu0 0.0
      %737 = vmatpush1.msra.mxu0 0.0
      %738 = vmatprep.subr.mxu0 0.0
      %739 = vmatpush1.msra.mxu0 0.0
      %740 = vmatprep.subr.mxu0 0.0
      %741 = vmatpush1.msra.mxu0 0.0
      %742 = vmatprep.subr.mxu0 0.0
      %743 = vmatpush1.msra.mxu0 0.0
      %744 = vmatprep.subr.mxu0 0.0
      %745 = vmatpush1.msra.mxu0 0.0
      %746 = vmatprep.subr.mxu0 0.0
      %747 = vmatpush1.msra.mxu0 0.0
      %748 = vmatprep.subr.mxu0 0.0
      %749 = vmatpush1.msra.mxu0 0.0
      %750 = vmatprep.subr.mxu0 0.0
      %751 = vmatpush1.msra.mxu0 0.0
      %752 = vmatprep.subr.mxu0 0.0
      %753 = vmatpush1.msra.mxu0 0.0
      %754 = vmatprep.subr.mxu0 0.0
      %755 = vmatpush1.msra.mxu0 0.0
      %756 = vmatprep.mubr.f32.mxu0 0.0
      %757 = vmatmul.mubr.f32.gmra.mrb[0].mxu0 %v603
      %v758 = vpop.f32.mrb[0].mxu0
      %v759 = vadd.f32 %v600, %v758
      %v760 = vpop.f32.mrb[0].mxu0
      %761 = vmatprep.mubr.f32.mxu0 0.0
      %762 = vmatmul.mubr.f32.gmra.mrb[0].mxu0 %v606
      %v763 = vpop.f32.mrb[0].mxu0
      %v764 = vadd.f32 %v600, %v763
      %v765 = vpop.f32.mrb[0].mxu0
      %766 = vmatprep.mubr.f32.mxu0 0.0
      %767 = vmatmul.mubr.f32.gmra.mrb[0].mxu0 %v609
      %v768 = vpop.f32.mrb[0].mxu0
      %v769 = vadd.f32 %v600, %v768
      %v770 = vpop.f32.mrb[0].mxu0
      %771 = vmatprep.mubr.f32.mxu0 0.0
      %772 = vmatmul.mubr.f32.gmra.mrb[0].mxu0 %v612
      %v773 = vpop.f32.mrb[0].mxu0
      %v774 = vadd.f32 %v600, %v773
      %v775 = vpop.f32.mrb[0].mxu0
      %776 = vmatprep.mubr.f32.mxu0 0.0
      %777 = vmatmul.mubr.f32.gmra.mrb[0].mxu0 %v615
      %v778 = vpop.f32.mrb[0].mxu0
      %v779 = vadd.f32 %v600, %v778
      %v780 = vpop.f32.mrb[0].mxu0
      %781 = vmatprep.mubr.f32.mxu0 0.0
      %782 = vmatmul.mubr.f32.gmra.mrb[0].mxu0 %v618
      %v783 = vpop.f32.mrb[0].mxu0
      %v784 = vadd.f32 %v600, %v783
      %v785 = vpop.f32.mrb[0].mxu0
      %786 = vmatprep.mubr.f32.mxu0 0.0
      %787 = vmatmul.mubr.f32.gmra.mrb[0].mxu0 %v621
      %v788 = vpop.f32.mrb[0].mxu0
      %v789 = vadd.f32 %v600, %v788
      %v790 = vpop.f32.mrb[0].mxu0
      %791 = vmatprep.mubr.f32.mxu0 0.0
      %792 = vmatmul.mubr.f32.gmra.mrb[0].mxu0 %v624
      %v793 = vpop.f32.mrb[0].mxu0
      %v794 = vadd.f32 %v600, %v793
      %v795 = vpop.f32.mrb[0].mxu0
      %796 = vmatprep.mubr.f32.mxu0 0.0
      %797 = vmatmul.mubr.f32.gmra.mrb[0].mxu0 %v627
      %v798 = vpop.f32.mrb[0].mxu0
      %v799 = vadd.f32 %v600, %v798
      %v800 = vpop.f32.mrb[0].mxu0
      %801 = vmatprep.mubr.f32.mxu0 0.0
      %802 = vmatmul.mubr.f32.gmra.mrb[0].mxu0 %v630
      %v803 = vpop.f32.mrb[0].mxu0
      %v804 = vadd.f32 %v600, %v803
      %v805 = vpop.f32.mrb[0].mxu0
      %806 = vmatprep.mubr.f32.mxu0 0.0
      %807 = vmatmul.mubr.f32.gmra.mrb[0].mxu0 %v633
      %v808 = vpop.f32.mrb[0].mxu0
      %v809 = vadd.f32 %v600, %v808
      %v810 = vpop.f32.mrb[0].mxu0
      %811 = vmatprep.mubr.f32.mxu0 0.0
      %812 = vmatmul.mubr.f32.gmra.mrb[0].mxu0 %v636
      %v813 = vpop.f32.mrb[0].mxu0
      %v814 = vadd.f32 %v600, %v813
      %v815 = vpop.f32.mrb[0].mxu0
      %816 = vmatprep.mubr.f32.mxu0 0.0
      %817 = vmatmul.mubr.f32.gmra.mrb[0].mxu0 %v639
      %v818 = vpop.f32.mrb[0].mxu0
      %v819 = vadd.f32 %v600, %v818
      %v820 = vpop.f32.mrb[0].mxu0
      %821 = vmatprep.mubr.f32.mxu0 0.0
      %822 = vmatmul.mubr.f32.gmra.mrb[0].mxu0 %v642
      %v823 = vpop.f32.mrb[0].mxu0
      %v824 = vadd.f32 %v600, %v823
      %v825 = vpop.f32.mrb[0].mxu0
      %826 = vmatprep.mubr.f32.mxu0 0.0
      %827 = vmatmul.mubr.f32.gmra.mrb[0].mxu0 %v645
      %v828 = vpop.f32.mrb[0].mxu0
      %v829 = vadd.f32 %v600, %v828
      %v830 = vpop.f32.mrb[0].mxu0
      %831 = vmatprep.mubr.f32.mxu0 0.0
      %832 = vmatmul.mubr.f32.gmra.mrb[0].mxu0 %v648
      %v833 = vpop.f32.mrb[0].mxu0
      %v834 = vadd.f32 %v600, %v833
      %v835 = vpop.f32.mrb[0].mxu0
      %836 = vmatprep.mubr.f32.mxu0 0.0
      %837 = vmatmul.mubr.f32.gmra.mrb[0].mxu0 %v651
      %v838 = vpop.f32.mrb[0].mxu0
      %v839 = vadd.f32 %v600, %v838
      %v840 = vpop.f32.mrb[0].mxu0
      %841 = vmatprep.mubr.f32.mxu0 0.0
      %842 = vmatmul.mubr.f32.gmra.mrb[0].mxu0 %v654
      %v843 = vpop.f32.mrb[0].mxu0
      %v844 = vadd.f32 %v600, %v843
      %v845 = vpop.f32.mrb[0].mxu0
      %846 = vmatprep.mubr.f32.mxu0 0.0
      %847 = vmatmul.mubr.f32.gmra.mrb[0].mxu0 %v657
      %v848 = vpop.f32.mrb[0].mxu0
      %v849 = vadd.f32 %v600, %v848
      %v850 = vpop.f32.mrb[0].mxu0
      %851 = vmatprep.mubr.f32.mxu0 0.0
      %852 = vmatmul.mubr.f32.gmra.mrb[0].mxu0 %v660
      %v853 = vpop.f32.mrb[0].mxu0
      %v854 = vadd.f32 %v600, %v853
      %v855 = vpop.f32.mrb[0].mxu0
      %856 = vmatprep.mubr.f32.mxu0 0.0
      %857 = vmatmul.mubr.f32.gmra.mrb[0].mxu0 %v663
      %v858 = vpop.f32.mrb[0].mxu0
      %v859 = vadd.f32 %v600, %v858
      %v860 = vpop.f32.mrb[0].mxu0
      %861 = vmatprep.mubr.f32.mxu0 0.0
      %862 = vmatmul.mubr.f32.gmra.mrb[0].mxu0 %v666
      %v863 = vpop.f32.mrb[0].mxu0
      %v864 = vadd.f32 %v600, %v863
      %v865 = vpop.f32.mrb[0].mxu0
      %866 = vmatprep.mubr.f32.mxu0 0.0
      %867 = vmatmul.mubr.f32.gmra.mrb[0].mxu0 %v669
      %v868 = vpop.f32.mrb[0].mxu0
      %v869 = vadd.f32 %v600, %v868
      %v870 = vpop.f32.mrb[0].mxu0
      %871 = vmatprep.mubr.f32.mxu0 0.0
      %872 = vmatmul.mubr.f32.gmra.mrb[0].mxu0 %v672
      %v873 = vpop.f32.mrb[0].mxu0
      %v874 = vadd.f32 %v600, %v873
      %v875 = vpop.f32.mrb[0].mxu0
      %876 = vmatprep.mubr.f32.mxu0 0.0
      %877 = vmatmul.mubr.f32.gmra.mrb[0].mxu0 %v675
      %v878 = vpop.f32.mrb[0].mxu0
      %v879 = vadd.f32 %v600, %v878
      %v880 = vpop.f32.mrb[0].mxu0
      %881 = vmatprep.mubr.f32.mxu0 0.0
      %882 = vmatmul.mubr.f32.gmra.mrb[0].mxu0 %v678
      %v883 = vpop.f32.mrb[0].mxu0
      %v884 = vadd.f32 %v600, %v883
      %v885 = vpop.f32.mrb[0].mxu0
      %886 = vmatprep.mubr.f32.mxu0 0.0
      %887 = vmatmul.mubr.f32.gmra.mrb[0].mxu0 %v681
      %v888 = vpop.f32.mrb[0].mxu0
      %v889 = vadd.f32 %v600, %v888
      %v890 = vpop.f32.mrb[0].mxu0
      %891 = vmatprep.mubr.f32.mxu0 0.0
      %892 = vmatmul.mubr.f32.gmra.mrb[0].mxu0 %v684
      %v893 = vpop.f32.mrb[0].mxu0
      %v894 = vadd.f32 %v600, %v893
      %v895 = vpop.f32.mrb[0].mxu0
      %896 = vmatprep.mubr.f32.mxu0 0.0
      %897 = vmatmul.mubr.f32.gmra.mrb[0].mxu0 %v687
      %v898 = vpop.f32.mrb[0].mxu0
      %v899 = vadd.f32 %v600, %v898
      %v900 = vpop.f32.mrb[0].mxu0
      %901 = vmatprep.mubr.f32.mxu0 0.0
      %902 = vmatmul.mubr.f32.gmra.mrb[0].mxu0 %v690
      %v903 = vpop.f32.mrb[0].mxu0
      %v904 = vadd.f32 %v600, %v903
      %v905 = vpop.f32.mrb[0].mxu0
      %906 = vdwg.mxu0
      %v907 = vmax.f32 %v759, 0.0
      %v908 = vmax.f32 %v764, 0.0
      %v909 = vmax.f32 %v769, 0.0
      %v910 = vmax.f32 %v774, 0.0
      %v911 = vmax.f32 %v779, 0.0
      %v912 = vmax.f32 %v784, 0.0
      %v913 = vmax.f32 %v789, 0.0
      %v914 = vmax.f32 %v794, 0.0
      %v915 = vmax.f32 %v799, 0.0
      %v916 = vmax.f32 %v804, 0.0
      %v917 = vmax.f32 %v809, 0.0
      %v918 = vmax.f32 %v814, 0.0
      %v919 = vmax.f32 %v819, 0.0
      %v920 = vmax.f32 %v824, 0.0
      %v921 = vmax.f32 %v829, 0.0
      %v922 = vmax.f32 %v834, 0.0
      %v923 = vmax.f32 %v839, 0.0
      %v924 = vmax.f32 %v844, 0.0
      %v925 = vmax.f32 %v849, 0.0
      %v926 = vmax.f32 %v854, 0.0
      %v927 = vmax.f32 %v859, 0.0
      %v928 = vmax.f32 %v864, 0.0
      %v929 = vmax.f32 %v869, 0.0
      %v930 = vmax.f32 %v874, 0.0
      %v931 = vmax.f32 %v879, 0.0
      %v932 = vmax.f32 %v884, 0.0
      %v933 = vmax.f32 %v889, 0.0
      %v934 = vmax.f32 %v894, 0.0
      %v935 = vmax.f32 %v899, 0.0
      %v936 = vmax.f32 %v904, 0.0
      %v937 = vmin.f32 %v907, 6.0
      %v938 = vmin.f32 %v908, 6.0
      %v939 = vmin.f32 %v909, 6.0
      %v940 = vmin.f32 %v910, 6.0
      %v941 = vmin.f32 %v911, 6.0
      %v942 = vmin.f32 %v912, 6.0
      %v943 = vmin.f32 %v913, 6.0
      %v944 = vmin.f32 %v914, 6.0
      %v945 = vmin.f32 %v915, 6.0
      %v946 = vmin.f32 %v916, 6.0
      %v947 = vmin.f32 %v917, 6.0
      %v948 = vmin.f32 %v918, 6.0
      %v949 = vmin.f32 %v919, 6.0
      %v950 = vmin.f32 %v920, 6.0
      %v951 = vmin.f32 %v921, 6.0
      %v952 = vmin.f32 %v922, 6.0
      %v953 = vmin.f32 %v923, 6.0
      %v954 = vmin.f32 %v924, 6.0
      %v955 = vmin.f32 %v925, 6.0
      %v956 = vmin.f32 %v926, 6.0
      %v957 = vmin.f32 %v927, 6.0
      %v958 = vmin.f32 %v928, 6.0
      %v959 = vmin.f32 %v929, 6.0
      %v960 = vmin.f32 %v930, 6.0
      %v961 = vmin.f32 %v931, 6.0
      %v962 = vmin.f32 %v932, 6.0
      %v963 = vmin.f32 %v933, 6.0
      %v964 = vmin.f32 %v934, 6.0
      %v965 = vmin.f32 %v935, 6.0
      %v966 = vmin.f32 %v936, 6.0
      %v967 = vlaneseq
      %v968 = vshrl.u32 %v967, 7
      %v969 = vadd.s32 %v968, 8
      %v970 = vadd.s32 %v968, 16
      %p971 = scmp.gt.s32.totalorder %s25, 0
      %s972 = scalar_select %p971, 1, 0
      %v973 = vstv %s972
      %vm974 = vcmp.eq.s32.totalorder %v973, 1
      %p975 = scmp.lt.s32.totalorder %s25, 1
      %s976 = scalar_select %p975, 1, 0
      %v977 = vstv %s976
      %vm978 = vcmp.eq.s32.totalorder %v977, 1
      %vm979 = vcmp.ge.s32.totalorder %v968, 1
      %vm980 = vcmp.ge.s32.totalorder %v969, 1
      %vm981 = vcmp.ge.s32.totalorder %v970, 1
      %vm982 = vcmp.le.s32.totalorder %v968, 16
      %vm983 = vcmp.le.s32.totalorder %v969, 16
      %vm984 = vcmp.le.s32.totalorder %v970, 16
      %vm985 = vmand %vm979, %vm982
      %vm986 = vmand %vm980, %vm983
      %vm987 = vmand %vm981, %vm984
      %vm988 = vmand %vm974, %vm985
      %vm989 = vmand %vm974, %vm986
      %vm990 = vmand %vm974, %vm987
      %vm991 = vmand 1, %vm985
      %vm992 = vmand 1, %vm986
      %vm993 = vmand 1, %vm987
      %vm994 = vmand %vm978, %vm985
      %vm995 = vmand %vm978, %vm986
      %vm996 = vmand %vm978, %vm987
      %v997 = vsel %vm988, 1, 0
      %v998 = vsel %vm989, 1, 0
      %v999 = vsel %vm990, 1, 0
      %v1000 = vsel %vm991, 1, 0
      %v1001 = vsel %vm992, 1, 0
      %v1002 = vsel %vm993, 1, 0
      %v1003 = vsel %vm994, 1, 0
      %v1004 = vsel %vm995, 1, 0
      %v1005 = vsel %vm996, 1, 0
      %vm1006 = vcmp.eq.s32.totalorder %v997, 1
      %vm1007 = vcmp.eq.s32.totalorder %v998, 1
      %vm1008 = vcmp.eq.s32.totalorder %v999, 1
      %vm1009 = vcmp.eq.s32.totalorder %v1000, 1
      %vm1010 = vcmp.eq.s32.totalorder %v1001, 1
      %vm1011 = vcmp.eq.s32.totalorder %v1002, 1
      %vm1012 = vcmp.eq.s32.totalorder %v1003, 1
      %vm1013 = vcmp.eq.s32.totalorder %v1004, 1
      %vm1014 = vcmp.eq.s32.totalorder %v1005, 1
      %v1015 = vsel %vm1006, %v937, 0.0
      %v1016 = vsel %vm1007, %v938, 0.0
      %v1017 = vsel %vm1008, %v939, 0.0
      %v1018 = vsel %vm1009, %v940, 0.0
      %v1019 = vsel %vm1010, %v941, 0.0
      %v1020 = vsel %vm1011, %v942, 0.0
      %v1021 = vsel %vm1009, %v943, 0.0
      %v1022 = vsel %vm1010, %v944, 0.0
      %v1023 = vsel %vm1011, %v945, 0.0
      %v1024 = vsel %vm1009, %v946, 0.0
      %v1025 = vsel %vm1010, %v947, 0.0
      %v1026 = vsel %vm1011, %v948, 0.0
      %v1027 = vsel %vm1009, %v949, 0.0
      %v1028 = vsel %vm1010, %v950, 0.0
      %v1029 = vsel %vm1011, %v951, 0.0
      %v1030 = vsel %vm1009, %v952, 0.0
      %v1031 = vsel %vm1010, %v953, 0.0
      %v1032 = vsel %vm1011, %v954, 0.0
      %v1033 = vsel %vm1009, %v955, 0.0
      %v1034 = vsel %vm1010, %v956, 0.0
      %v1035 = vsel %vm1011, %v957, 0.0
      %v1036 = vsel %vm1009, %v958, 0.0
      %v1037 = vsel %vm1010, %v959, 0.0
      %v1038 = vsel %vm1011, %v960, 0.0
      %v1039 = vsel %vm1009, %v961, 0.0
      %v1040 = vsel %vm1010, %v962, 0.0
      %v1041 = vsel %vm1011, %v963, 0.0
      %v1042 = vsel %vm1012, %v964, 0.0
      %v1043 = vsel %vm1013, %v965, 0.0
      %v1044 = vsel %vm1014, %v966, 0.0
      %v1045 = vld [vmem:[%s5] sm:$0xff]
      %v1046 = vld [vmem:[%s5 + $0x8] sm:$0x1]
      %v1047 = vlaneseq
      %v1048 = vshrl.u32 %v1047, 7
      %v1049 = vsub.s32 0, %v1048
      %v1050 = vrot.slane %v1045, %v1049
      %v1051 = vmul.f32 %v1015, %v1050
      %v1052 = vmul.f32 %v1016, %v1050
      %v1053 = vmul.f32 %v1018, %v1050
      %v1054 = vmul.f32 %v1019, %v1050
      %v1055 = vmul.f32 %v1021, %v1050
      %v1056 = vmul.f32 %v1022, %v1050
      %v1057 = vmul.f32 %v1024, %v1050
      %v1058 = vmul.f32 %v1025, %v1050
      %v1059 = vmul.f32 %v1027, %v1050
      %v1060 = vmul.f32 %v1028, %v1050
      %v1061 = vmul.f32 %v1030, %v1050
      %v1062 = vmul.f32 %v1031, %v1050
      %v1063 = vmul.f32 %v1033, %v1050
      %v1064 = vmul.f32 %v1034, %v1050
      %v1065 = vmul.f32 %v1036, %v1050
      %v1066 = vmul.f32 %v1037, %v1050
      %v1067 = vadd.f32 %v1051, 0.0
      %v1068 = vadd.f32 %v1052, 0.0
      %v1069 = vadd.f32 %v1053, 0.0
      %v1070 = vadd.f32 %v1054, 0.0
      %v1071 = vadd.f32 %v1055, 0.0
      %v1072 = vadd.f32 %v1056, 0.0
      %v1073 = vadd.f32 %v1057, 0.0
      %v1074 = vadd.f32 %v1058, 0.0
      %v1075 = vadd.f32 %v1059, 0.0
      %v1076 = vadd.f32 %v1060, 0.0
      %v1077 = vadd.f32 %v1061, 0.0
      %v1078 = vadd.f32 %v1062, 0.0
      %v1079 = vadd.f32 %v1063, 0.0
      %v1080 = vadd.f32 %v1064, 0.0
      %v1081 = vadd.f32 %v1065, 0.0
      %v1082 = vadd.f32 %v1066, 0.0
      %v1083 = vlaneseq
      %v1084 = vshrl.u32 %v1083, 7
      %v1085 = vsub.s32 1, %v1084
      %v1086 = vrot.slane %v1045, %v1085
      %v1087 = vmul.f32 %v1015, %v1086
      %v1088 = vmul.f32 %v1016, %v1086
      %v1089 = vmul.f32 %v1017, %v1086
      %v1090 = vmul.f32 %v1018, %v1086
      %v1091 = vmul.f32 %v1019, %v1086
      %v1092 = vmul.f32 %v1020, %v1086
      %v1093 = vmul.f32 %v1021, %v1086
      %v1094 = vmul.f32 %v1022, %v1086
      %v1095 = vmul.f32 %v1023, %v1086
      %v1096 = vmul.f32 %v1024, %v1086
      %v1097 = vmul.f32 %v1025, %v1086
      %v1098 = vmul.f32 %v1026, %v1086
      %v1099 = vmul.f32 %v1027, %v1086
      %v1100 = vmul.f32 %v1028, %v1086
      %v1101 = vmul.f32 %v1029, %v1086
      %v1102 = vmul.f32 %v1030, %v1086
      %v1103 = vmul.f32 %v1031, %v1086
      %v1104 = vmul.f32 %v1032, %v1086
      %v1105 = vmul.f32 %v1033, %v1086
      %v1106 = vmul.f32 %v1034, %v1086
      %v1107 = vmul.f32 %v1035, %v1086
      %v1108 = vmul.f32 %v1036, %v1086
      %v1109 = vmul.f32 %v1037, %v1086
      %v1110 = vmul.f32 %v1038, %v1086
      %vm1135 = vcmask 1046528
      %v1136 = vrot.slane %v1087, 1
      %v1137 = vrot.slane %v1088, 1
      %v1138 = vsel %vm1135, %v1136, %v1137
      %v1139 = vrot.slane %v1089, 1
      %v1140 = vsel %vm1135, %v1137, %v1139
      %v1141 = vrot.slane %v1090, 1
      %v1142 = vrot.slane %v1091, 1
      %v1143 = vsel %vm1135, %v1141, %v1142
      %v1144 = vrot.slane %v1092, 1
      %v1145 = vsel %vm1135, %v1142, %v1144
      %v1146 = vrot.slane %v1093, 1
      %v1147 = vrot.slane %v1094, 1
      %v1148 = vsel %vm1135, %v1146, %v1147
      %v1149 = vrot.slane %v1095, 1
      %v1150 = vsel %vm1135, %v1147, %v1149
      %v1151 = vrot.slane %v1096, 1
      %v1152 = vrot.slane %v1097, 1
      %v1153 = vsel %vm1135, %v1151, %v1152
      %v1154 = vrot.slane %v1098, 1
      %v1155 = vsel %vm1135, %v1152, %v1154
      %v1156 = vrot.slane %v1099, 1
      %v1157 = vrot.slane %v1100, 1
      %v1158 = vsel %vm1135, %v1156, %v1157
      %v1159 = vrot.slane %v1101, 1
      %v1160 = vsel %vm1135, %v1157, %v1159
      %v1161 = vrot.slane %v1102, 1
      %v1162 = vrot.slane %v1103, 1
      %v1163 = vsel %vm1135, %v1161, %v1162
      %v1164 = vrot.slane %v1104, 1
      %v1165 = vsel %vm1135, %v1162, %v1164
      %v1166 = vrot.slane %v1105, 1
      %v1167 = vrot.slane %v1106, 1
      %v1168 = vsel %vm1135, %v1166, %v1167
      %v1169 = vrot.slane %v1107, 1
      %v1170 = vsel %vm1135, %v1167, %v1169
      %v1171 = vrot.slane %v1108, 1
      %v1172 = vrot.slane %v1109, 1
      %v1173 = vsel %vm1135, %v1171, %v1172
      %v1174 = vrot.slane %v1110, 1
      %v1175 = vsel %vm1135, %v1172, %v1174
      %v1192 = vadd.f32 %v1067, %v1138
      %v1193 = vadd.f32 %v1068, %v1140
      %v1194 = vadd.f32 %v1069, %v1143
      %v1195 = vadd.f32 %v1070, %v1145
      %v1196 = vadd.f32 %v1071, %v1148
      %v1197 = vadd.f32 %v1072, %v1150
      %v1198 = vadd.f32 %v1073, %v1153
      %v1199 = vadd.f32 %v1074, %v1155
      %v1200 = vadd.f32 %v1075, %v1158
      %v1201 = vadd.f32 %v1076, %v1160
      %v1202 = vadd.f32 %v1077, %v1163
      %v1203 = vadd.f32 %v1078, %v1165
      %v1204 = vadd.f32 %v1079, %v1168
      %v1205 = vadd.f32 %v1080, %v1170
      %v1206 = vadd.f32 %v1081, %v1173
      %v1207 = vadd.f32 %v1082, %v1175
      %v1208 = vlaneseq
      %v1209 = vshrl.u32 %v1208, 7
      %v1210 = vsub.s32 2, %v1209
      %v1211 = vrot.slane %v1045, %v1210
      %v1212 = vmul.f32 %v1015, %v1211
      %v1213 = vmul.f32 %v1016, %v1211
      %v1214 = vmul.f32 %v1017, %v1211
      %v1215 = vmul.f32 %v1018, %v1211
      %v1216 = vmul.f32 %v1019, %v1211
      %v1217 = vmul.f32 %v1020, %v1211
      %v1218 = vmul.f32 %v1021, %v1211
      %v1219 = vmul.f32 %v1022, %v1211
      %v1220 = vmul.f32 %v1023, %v1211
      %v1221 = vmul.f32 %v1024, %v1211
      %v1222 = vmul.f32 %v1025, %v1211
      %v1223 = vmul.f32 %v1026, %v1211
      %v1224 = vmul.f32 %v1027, %v1211
      %v1225 = vmul.f32 %v1028, %v1211
      %v1226 = vmul.f32 %v1029, %v1211
      %v1227 = vmul.f32 %v1030, %v1211
      %v1228 = vmul.f32 %v1031, %v1211
      %v1229 = vmul.f32 %v1032, %v1211
      %v1230 = vmul.f32 %v1033, %v1211
      %v1231 = vmul.f32 %v1034, %v1211
      %v1232 = vmul.f32 %v1035, %v1211
      %v1233 = vmul.f32 %v1036, %v1211
      %v1234 = vmul.f32 %v1037, %v1211
      %v1235 = vmul.f32 %v1038, %v1211
      %vm1260 = vcmask 1045504
      %v1261 = vrot.slane %v1212, 2
      %v1262 = vrot.slane %v1213, 2
      %v1263 = vsel %vm1260, %v1261, %v1262
      %v1264 = vrot.slane %v1214, 2
      %v1265 = vsel %vm1260, %v1262, %v1264
      %v1266 = vrot.slane %v1215, 2
      %v1267 = vrot.slane %v1216, 2
      %v1268 = vsel %vm1260, %v1266, %v1267
      %v1269 = vrot.slane %v1217, 2
      %v1270 = vsel %vm1260, %v1267, %v1269
      %v1271 = vrot.slane %v1218, 2
      %v1272 = vrot.slane %v1219, 2
      %v1273 = vsel %vm1260, %v1271, %v1272
      %v1274 = vrot.slane %v1220, 2
      %v1275 = vsel %vm1260, %v1272, %v1274
      %v1276 = vrot.slane %v1221, 2
      %v1277 = vrot.slane %v1222, 2
      %v1278 = vsel %vm1260, %v1276, %v1277
      %v1279 = vrot.slane %v1223, 2
      %v1280 = vsel %vm1260, %v1277, %v1279
      %v1281 = vrot.slane %v1224, 2
      %v1282 = vrot.slane %v1225, 2
      %v1283 = vsel %vm1260, %v1281, %v1282
      %v1284 = vrot.slane %v1226, 2
      %v1285 = vsel %vm1260, %v1282, %v1284
      %v1286 = vrot.slane %v1227, 2
      %v1287 = vrot.slane %v1228, 2
      %v1288 = vsel %vm1260, %v1286, %v1287
      %v1289 = vrot.slane %v1229, 2
      %v1290 = vsel %vm1260, %v1287, %v1289
      %v1291 = vrot.slane %v1230, 2
      %v1292 = vrot.slane %v1231, 2
      %v1293 = vsel %vm1260, %v1291, %v1292
      %v1294 = vrot.slane %v1232, 2
      %v1295 = vsel %vm1260, %v1292, %v1294
      %v1296 = vrot.slane %v1233, 2
      %v1297 = vrot.slane %v1234, 2
      %v1298 = vsel %vm1260, %v1296, %v1297
      %v1299 = vrot.slane %v1235, 2
      %v1300 = vsel %vm1260, %v1297, %v1299
      %v1317 = vadd.f32 %v1192, %v1263
      %v1318 = vadd.f32 %v1193, %v1265
      %v1319 = vadd.f32 %v1194, %v1268
      %v1320 = vadd.f32 %v1195, %v1270
      %v1321 = vadd.f32 %v1196, %v1273
      %v1322 = vadd.f32 %v1197, %v1275
      %v1323 = vadd.f32 %v1198, %v1278
      %v1324 = vadd.f32 %v1199, %v1280
      %v1325 = vadd.f32 %v1200, %v1283
      %v1326 = vadd.f32 %v1201, %v1285
      %v1327 = vadd.f32 %v1202, %v1288
      %v1328 = vadd.f32 %v1203, %v1290
      %v1329 = vadd.f32 %v1204, %v1293
      %v1330 = vadd.f32 %v1205, %v1295
      %v1331 = vadd.f32 %v1206, %v1298
      %v1332 = vadd.f32 %v1207, %v1300
      %v1333 = vlaneseq
      %v1334 = vshrl.u32 %v1333, 7
      %v1335 = vsub.s32 3, %v1334
      %v1336 = vrot.slane %v1045, %v1335
      %v1337 = vmul.f32 %v1018, %v1336
      %v1338 = vmul.f32 %v1019, %v1336
      %v1339 = vmul.f32 %v1021, %v1336
      %v1340 = vmul.f32 %v1022, %v1336
      %v1341 = vmul.f32 %v1024, %v1336
      %v1342 = vmul.f32 %v1025, %v1336
      %v1343 = vmul.f32 %v1027, %v1336
      %v1344 = vmul.f32 %v1028, %v1336
      %v1345 = vmul.f32 %v1030, %v1336
      %v1346 = vmul.f32 %v1031, %v1336
      %v1347 = vmul.f32 %v1033, %v1336
      %v1348 = vmul.f32 %v1034, %v1336
      %v1349 = vmul.f32 %v1036, %v1336
      %v1350 = vmul.f32 %v1037, %v1336
      %v1351 = vmul.f32 %v1039, %v1336
      %v1352 = vmul.f32 %v1040, %v1336
      %v1353 = vadd.f32 %v1317, %v1337
      %v1354 = vadd.f32 %v1318, %v1338
      %v1355 = vadd.f32 %v1319, %v1339
      %v1356 = vadd.f32 %v1320, %v1340
      %v1357 = vadd.f32 %v1321, %v1341
      %v1358 = vadd.f32 %v1322, %v1342
      %v1359 = vadd.f32 %v1323, %v1343
      %v1360 = vadd.f32 %v1324, %v1344
      %v1361 = vadd.f32 %v1325, %v1345
      %v1362 = vadd.f32 %v1326, %v1346
      %v1363 = vadd.f32 %v1327, %v1347
      %v1364 = vadd.f32 %v1328, %v1348
      %v1365 = vadd.f32 %v1329, %v1349
      %v1366 = vadd.f32 %v1330, %v1350
      %v1367 = vadd.f32 %v1331, %v1351
      %v1368 = vadd.f32 %v1332, %v1352
      %v1369 = vlaneseq
      %v1370 = vshrl.u32 %v1369, 7
      %v1371 = vsub.s32 4, %v1370
      %v1372 = vrot.slane %v1045, %v1371
      %v1373 = vmul.f32 %v1018, %v1372
      %v1374 = vmul.f32 %v1019, %v1372
      %v1375 = vmul.f32 %v1020, %v1372
      %v1376 = vmul.f32 %v1021, %v1372
      %v1377 = vmul.f32 %v1022, %v1372
      %v1378 = vmul.f32 %v1023, %v1372
      %v1379 = vmul.f32 %v1024, %v1372
      %v1380 = vmul.f32 %v1025, %v1372
      %v1381 = vmul.f32 %v1026, %v1372
      %v1382 = vmul.f32 %v1027, %v1372
      %v1383 = vmul.f32 %v1028, %v1372
      %v1384 = vmul.f32 %v1029, %v1372
      %v1385 = vmul.f32 %v1030, %v1372
      %v1386 = vmul.f32 %v1031, %v1372
      %v1387 = vmul.f32 %v1032, %v1372
      %v1388 = vmul.f32 %v1033, %v1372
      %v1389 = vmul.f32 %v1034, %v1372
      %v1390 = vmul.f32 %v1035, %v1372
      %v1391 = vmul.f32 %v1036, %v1372
      %v1392 = vmul.f32 %v1037, %v1372
      %v1393 = vmul.f32 %v1038, %v1372
      %v1394 = vmul.f32 %v1039, %v1372
      %v1395 = vmul.f32 %v1040, %v1372
      %v1396 = vmul.f32 %v1041, %v1372
      %v1421 = vrot.slane %v1373, 1
      %v1422 = vrot.slane %v1374, 1
      %v1423 = vsel %vm1135, %v1421, %v1422
      %v1424 = vrot.slane %v1375, 1
      %v1425 = vsel %vm1135, %v1422, %v1424
      %v1426 = vrot.slane %v1376, 1
      %v1427 = vrot.slane %v1377, 1
      %v1428 = vsel %vm1135, %v1426, %v1427
      %v1429 = vrot.slane %v1378, 1
      %v1430 = vsel %vm1135, %v1427, %v1429
      %v1431 = vrot.slane %v1379, 1
      %v1432 = vrot.slane %v1380, 1
      %v1433 = vsel %vm1135, %v1431, %v1432
      %v1434 = vrot.slane %v1381, 1
      %v1435 = vsel %vm1135, %v1432, %v1434
      %v1436 = vrot.slane %v1382, 1
      %v1437 = vrot.slane %v1383, 1
      %v1438 = vsel %vm1135, %v1436, %v1437
      %v1439 = vrot.slane %v1384, 1
      %v1440 = vsel %vm1135, %v1437, %v1439
      %v1441 = vrot.slane %v1385, 1
      %v1442 = vrot.slane %v1386, 1
      %v1443 = vsel %vm1135, %v1441, %v1442
      %v1444 = vrot.slane %v1387, 1
      %v1445 = vsel %vm1135, %v1442, %v1444
      %v1446 = vrot.slane %v1388, 1
      %v1447 = vrot.slane %v1389, 1
      %v1448 = vsel %vm1135, %v1446, %v1447
      %v1449 = vrot.slane %v1390, 1
      %v1450 = vsel %vm1135, %v1447, %v1449
      %v1451 = vrot.slane %v1391, 1
      %v1452 = vrot.slane %v1392, 1
      %v1453 = vsel %vm1135, %v1451, %v1452
      %v1454 = vrot.slane %v1393, 1
      %v1455 = vsel %vm1135, %v1452, %v1454
      %v1456 = vrot.slane %v1394, 1
      %v1457 = vrot.slane %v1395, 1
      %v1458 = vsel %vm1135, %v1456, %v1457
      %v1459 = vrot.slane %v1396, 1
      %v1460 = vsel %vm1135, %v1457, %v1459
      %v1477 = vadd.f32 %v1353, %v1423
      %v1478 = vadd.f32 %v1354, %v1425
      %v1479 = vadd.f32 %v1355, %v1428
      %v1480 = vadd.f32 %v1356, %v1430
      %v1481 = vadd.f32 %v1357, %v1433
      %v1482 = vadd.f32 %v1358, %v1435
      %v1483 = vadd.f32 %v1359, %v1438
      %v1484 = vadd.f32 %v1360, %v1440
      %v1485 = vadd.f32 %v1361, %v1443
      %v1486 = vadd.f32 %v1362, %v1445
      %v1487 = vadd.f32 %v1363, %v1448
      %v1488 = vadd.f32 %v1364, %v1450
      %v1489 = vadd.f32 %v1365, %v1453
      %v1490 = vadd.f32 %v1366, %v1455
      %v1491 = vadd.f32 %v1367, %v1458
      %v1492 = vadd.f32 %v1368, %v1460
      %v1493 = vlaneseq
      %v1494 = vshrl.u32 %v1493, 7
      %v1495 = vsub.s32 5, %v1494
      %v1496 = vrot.slane %v1045, %v1495
      %v1497 = vmul.f32 %v1018, %v1496
      %v1498 = vmul.f32 %v1019, %v1496
      %v1499 = vmul.f32 %v1020, %v1496
      %v1500 = vmul.f32 %v1021, %v1496
      %v1501 = vmul.f32 %v1022, %v1496
      %v1502 = vmul.f32 %v1023, %v1496
      %v1503 = vmul.f32 %v1024, %v1496
      %v1504 = vmul.f32 %v1025, %v1496
      %v1505 = vmul.f32 %v1026, %v1496
      %v1506 = vmul.f32 %v1027, %v1496
      %v1507 = vmul.f32 %v1028, %v1496
      %v1508 = vmul.f32 %v1029, %v1496
      %v1509 = vmul.f32 %v1030, %v1496
      %v1510 = vmul.f32 %v1031, %v1496
      %v1511 = vmul.f32 %v1032, %v1496
      %v1512 = vmul.f32 %v1033, %v1496
      %v1513 = vmul.f32 %v1034, %v1496
      %v1514 = vmul.f32 %v1035, %v1496
      %v1515 = vmul.f32 %v1036, %v1496
      %v1516 = vmul.f32 %v1037, %v1496
      %v1517 = vmul.f32 %v1038, %v1496
      %v1518 = vmul.f32 %v1039, %v1496
      %v1519 = vmul.f32 %v1040, %v1496
      %v1520 = vmul.f32 %v1041, %v1496
      %v1545 = vrot.slane %v1497, 2
      %v1546 = vrot.slane %v1498, 2
      %v1547 = vsel %vm1260, %v1545, %v1546
      %v1548 = vrot.slane %v1499, 2
      %v1549 = vsel %vm1260, %v1546, %v1548
      %v1550 = vrot.slane %v1500, 2
      %v1551 = vrot.slane %v1501, 2
      %v1552 = vsel %vm1260, %v1550, %v1551
      %v1553 = vrot.slane %v1502, 2
      %v1554 = vsel %vm1260, %v1551, %v1553
      %v1555 = vrot.slane %v1503, 2
      %v1556 = vrot.slane %v1504, 2
      %v1557 = vsel %vm1260, %v1555, %v1556
      %v1558 = vrot.slane %v1505, 2
      %v1559 = vsel %vm1260, %v1556, %v1558
      %v1560 = vrot.slane %v1506, 2
      %v1561 = vrot.slane %v1507, 2
      %v1562 = vsel %vm1260, %v1560, %v1561
      %v1563 = vrot.slane %v1508, 2
      %v1564 = vsel %vm1260, %v1561, %v1563
      %v1565 = vrot.slane %v1509, 2
      %v1566 = vrot.slane %v1510, 2
      %v1567 = vsel %vm1260, %v1565, %v1566
      %v1568 = vrot.slane %v1511, 2
      %v1569 = vsel %vm1260, %v1566, %v1568
      %v1570 = vrot.slane %v1512, 2
      %v1571 = vrot.slane %v1513, 2
      %v1572 = vsel %vm1260, %v1570, %v1571
      %v1573 = vrot.slane %v1514, 2
      %v1574 = vsel %vm1260, %v1571, %v1573
      %v1575 = vrot.slane %v1515, 2
      %v1576 = vrot.slane %v1516, 2
      %v1577 = vsel %vm1260, %v1575, %v1576
      %v1578 = vrot.slane %v1517, 2
      %v1579 = vsel %vm1260, %v1576, %v1578
      %v1580 = vrot.slane %v1518, 2
      %v1581 = vrot.slane %v1519, 2
      %v1582 = vsel %vm1260, %v1580, %v1581
      %v1583 = vrot.slane %v1520, 2
      %v1584 = vsel %vm1260, %v1581, %v1583
      %v1601 = vadd.f32 %v1477, %v1547
      %v1602 = vadd.f32 %v1478, %v1549
      %v1603 = vadd.f32 %v1479, %v1552
      %v1604 = vadd.f32 %v1480, %v1554
      %v1605 = vadd.f32 %v1481, %v1557
      %v1606 = vadd.f32 %v1482, %v1559
      %v1607 = vadd.f32 %v1483, %v1562
      %v1608 = vadd.f32 %v1484, %v1564
      %v1609 = vadd.f32 %v1485, %v1567
      %v1610 = vadd.f32 %v1486, %v1569
      %v1611 = vadd.f32 %v1487, %v1572
      %v1612 = vadd.f32 %v1488, %v1574
      %v1613 = vadd.f32 %v1489, %v1577
      %v1614 = vadd.f32 %v1490, %v1579
      %v1615 = vadd.f32 %v1491, %v1582
      %v1616 = vadd.f32 %v1492, %v1584
      %v1617 = vlaneseq
      %v1618 = vshrl.u32 %v1617, 7
      %v1619 = vsub.s32 6, %v1618
      %v1620 = vrot.slane %v1045, %v1619
      %v1621 = vmul.f32 %v1021, %v1620
      %v1622 = vmul.f32 %v1022, %v1620
      %v1623 = vmul.f32 %v1024, %v1620
      %v1624 = vmul.f32 %v1025, %v1620
      %v1625 = vmul.f32 %v1027, %v1620
      %v1626 = vmul.f32 %v1028, %v1620
      %v1627 = vmul.f32 %v1030, %v1620
      %v1628 = vmul.f32 %v1031, %v1620
      %v1629 = vmul.f32 %v1033, %v1620
      %v1630 = vmul.f32 %v1034, %v1620
      %v1631 = vmul.f32 %v1036, %v1620
      %v1632 = vmul.f32 %v1037, %v1620
      %v1633 = vmul.f32 %v1039, %v1620
      %v1634 = vmul.f32 %v1040, %v1620
      %v1635 = vmul.f32 %v1042, %v1620
      %v1636 = vmul.f32 %v1043, %v1620
      %v1637 = vadd.f32 %v1601, %v1621
      %v1638 = vadd.f32 %v1602, %v1622
      %v1639 = vadd.f32 %v1603, %v1623
      %v1640 = vadd.f32 %v1604, %v1624
      %v1641 = vadd.f32 %v1605, %v1625
      %v1642 = vadd.f32 %v1606, %v1626
      %v1643 = vadd.f32 %v1607, %v1627
      %v1644 = vadd.f32 %v1608, %v1628
      %v1645 = vadd.f32 %v1609, %v1629
      %v1646 = vadd.f32 %v1610, %v1630
      %v1647 = vadd.f32 %v1611, %v1631
      %v1648 = vadd.f32 %v1612, %v1632
      %v1649 = vadd.f32 %v1613, %v1633
      %v1650 = vadd.f32 %v1614, %v1634
      %v1651 = vadd.f32 %v1615, %v1635
      %v1652 = vadd.f32 %v1616, %v1636
      %v1653 = vlaneseq
      %v1654 = vshrl.u32 %v1653, 7
      %v1655 = vsub.s32 7, %v1654
      %v1656 = vrot.slane %v1045, %v1655
      %v1657 = vmul.f32 %v1021, %v1656
      %v1658 = vmul.f32 %v1022, %v1656
      %v1659 = vmul.f32 %v1023, %v1656
      %v1660 = vmul.f32 %v1024, %v1656
      %v1661 = vmul.f32 %v1025, %v1656
      %v1662 = vmul.f32 %v1026, %v1656
      %v1663 = vmul.f32 %v1027, %v1656
      %v1664 = vmul.f32 %v1028, %v1656
      %v1665 = vmul.f32 %v1029, %v1656
      %v1666 = vmul.f32 %v1030, %v1656
      %v1667 = vmul.f32 %v1031, %v1656
      %v1668 = vmul.f32 %v1032, %v1656
      %v1669 = vmul.f32 %v1033, %v1656
      %v1670 = vmul.f32 %v1034, %v1656
      %v1671 = vmul.f32 %v1035, %v1656
      %v1672 = vmul.f32 %v1036, %v1656
      %v1673 = vmul.f32 %v1037, %v1656
      %v1674 = vmul.f32 %v1038, %v1656
      %v1675 = vmul.f32 %v1039, %v1656
      %v1676 = vmul.f32 %v1040, %v1656
      %v1677 = vmul.f32 %v1041, %v1656
      %v1678 = vmul.f32 %v1042, %v1656
      %v1679 = vmul.f32 %v1043, %v1656
      %v1680 = vmul.f32 %v1044, %v1656
      %v1705 = vrot.slane %v1657, 1
      %v1706 = vrot.slane %v1658, 1
      %v1707 = vsel %vm1135, %v1705, %v1706
      %v1708 = vrot.slane %v1659, 1
      %v1709 = vsel %vm1135, %v1706, %v1708
      %v1710 = vrot.slane %v1660, 1
      %v1711 = vrot.slane %v1661, 1
      %v1712 = vsel %vm1135, %v1710, %v1711
      %v1713 = vrot.slane %v1662, 1
      %v1714 = vsel %vm1135, %v1711, %v1713
      %v1715 = vrot.slane %v1663, 1
      %v1716 = vrot.slane %v1664, 1
      %v1717 = vsel %vm1135, %v1715, %v1716
      %v1718 = vrot.slane %v1665, 1
      %v1719 = vsel %vm1135, %v1716, %v1718
      %v1720 = vrot.slane %v1666, 1
      %v1721 = vrot.slane %v1667, 1
      %v1722 = vsel %vm1135, %v1720, %v1721
      %v1723 = vrot.slane %v1668, 1
      %v1724 = vsel %vm1135, %v1721, %v1723
      %v1725 = vrot.slane %v1669, 1
      %v1726 = vrot.slane %v1670, 1
      %v1727 = vsel %vm1135, %v1725, %v1726
      %v1728 = vrot.slane %v1671, 1
      %v1729 = vsel %vm1135, %v1726, %v1728
      %v1730 = vrot.slane %v1672, 1
      %v1731 = vrot.slane %v1673, 1
      %v1732 = vsel %vm1135, %v1730, %v1731
      %v1733 = vrot.slane %v1674, 1
      %v1734 = vsel %vm1135, %v1731, %v1733
      %v1735 = vrot.slane %v1675, 1
      %v1736 = vrot.slane %v1676, 1
      %v1737 = vsel %vm1135, %v1735, %v1736
      %v1738 = vrot.slane %v1677, 1
      %v1739 = vsel %vm1135, %v1736, %v1738
      %v1740 = vrot.slane %v1678, 1
      %v1741 = vrot.slane %v1679, 1
      %v1742 = vsel %vm1135, %v1740, %v1741
      %v1743 = vrot.slane %v1680, 1
      %v1744 = vsel %vm1135, %v1741, %v1743
      %v1761 = vadd.f32 %v1637, %v1707
      %v1762 = vadd.f32 %v1638, %v1709
      %v1763 = vadd.f32 %v1639, %v1712
      %v1764 = vadd.f32 %v1640, %v1714
      %v1765 = vadd.f32 %v1641, %v1717
      %v1766 = vadd.f32 %v1642, %v1719
      %v1767 = vadd.f32 %v1643, %v1722
      %v1768 = vadd.f32 %v1644, %v1724
      %v1769 = vadd.f32 %v1645, %v1727
      %v1770 = vadd.f32 %v1646, %v1729
      %v1771 = vadd.f32 %v1647, %v1732
      %v1772 = vadd.f32 %v1648, %v1734
      %v1773 = vadd.f32 %v1649, %v1737
      %v1774 = vadd.f32 %v1650, %v1739
      %v1775 = vadd.f32 %v1651, %v1742
      %v1776 = vadd.f32 %v1652, %v1744
      %v1777 = vlaneseq
      %v1778 = vshrl.u32 %v1777, 7
      %v1779 = vsub.s32 0, %v1778
      %v1780 = vrot.slane %v1046, %v1779
      %v1781 = vmul.f32 %v1021, %v1780
      %v1782 = vmul.f32 %v1022, %v1780
      %v1783 = vmul.f32 %v1023, %v1780
      %v1784 = vmul.f32 %v1024, %v1780
      %v1785 = vmul.f32 %v1025, %v1780
      %v1786 = vmul.f32 %v1026, %v1780
      %v1787 = vmul.f32 %v1027, %v1780
      %v1788 = vmul.f32 %v1028, %v1780
      %v1789 = vmul.f32 %v1029, %v1780
      %v1790 = vmul.f32 %v1030, %v1780
      %v1791 = vmul.f32 %v1031, %v1780
      %v1792 = vmul.f32 %v1032, %v1780
      %v1793 = vmul.f32 %v1033, %v1780
      %v1794 = vmul.f32 %v1034, %v1780
      %v1795 = vmul.f32 %v1035, %v1780
      %v1796 = vmul.f32 %v1036, %v1780
      %v1797 = vmul.f32 %v1037, %v1780
      %v1798 = vmul.f32 %v1038, %v1780
      %v1799 = vmul.f32 %v1039, %v1780
      %v1800 = vmul.f32 %v1040, %v1780
      %v1801 = vmul.f32 %v1041, %v1780
      %v1802 = vmul.f32 %v1042, %v1780
      %v1803 = vmul.f32 %v1043, %v1780
      %v1804 = vmul.f32 %v1044, %v1780
      %v1829 = vrot.slane %v1781, 2
      %v1830 = vrot.slane %v1782, 2
      %v1831 = vsel %vm1260, %v1829, %v1830
      %v1832 = vrot.slane %v1783, 2
      %v1833 = vsel %vm1260, %v1830, %v1832
      %v1834 = vrot.slane %v1784, 2
      %v1835 = vrot.slane %v1785, 2
      %v1836 = vsel %vm1260, %v1834, %v1835
      %v1837 = vrot.slane %v1786, 2
      %v1838 = vsel %vm1260, %v1835, %v1837
      %v1839 = vrot.slane %v1787, 2
      %v1840 = vrot.slane %v1788, 2
      %v1841 = vsel %vm1260, %v1839, %v1840
      %v1842 = vrot.slane %v1789, 2
      %v1843 = vsel %vm1260, %v1840, %v1842
      %v1844 = vrot.slane %v1790, 2
      %v1845 = vrot.slane %v1791, 2
      %v1846 = vsel %vm1260, %v1844, %v1845
      %v1847 = vrot.slane %v1792, 2
      %v1848 = vsel %vm1260, %v1845, %v1847
      %v1849 = vrot.slane %v1793, 2
      %v1850 = vrot.slane %v1794, 2
      %v1851 = vsel %vm1260, %v1849, %v1850
      %v1852 = vrot.slane %v1795, 2
      %v1853 = vsel %vm1260, %v1850, %v1852
      %v1854 = vrot.slane %v1796, 2
      %v1855 = vrot.slane %v1797, 2
      %v1856 = vsel %vm1260, %v1854, %v1855
      %v1857 = vrot.slane %v1798, 2
      %v1858 = vsel %vm1260, %v1855, %v1857
      %v1859 = vrot.slane %v1799, 2
      %v1860 = vrot.slane %v1800, 2
      %v1861 = vsel %vm1260, %v1859, %v1860
      %v1862 = vrot.slane %v1801, 2
      %v1863 = vsel %vm1260, %v1860, %v1862
      %v1864 = vrot.slane %v1802, 2
      %v1865 = vrot.slane %v1803, 2
      %v1866 = vsel %vm1260, %v1864, %v1865
      %v1867 = vrot.slane %v1804, 2
      %v1868 = vsel %vm1260, %v1865, %v1867
      %v1885 = vadd.f32 %v1761, %v1831
      %v1886 = vadd.f32 %v1762, %v1833
      %v1887 = vadd.f32 %v1763, %v1836
      %v1888 = vadd.f32 %v1764, %v1838
      %v1889 = vadd.f32 %v1765, %v1841
      %v1890 = vadd.f32 %v1766, %v1843
      %v1891 = vadd.f32 %v1767, %v1846
      %v1892 = vadd.f32 %v1768, %v1848
      %v1893 = vadd.f32 %v1769, %v1851
      %v1894 = vadd.f32 %v1770, %v1853
      %v1895 = vadd.f32 %v1771, %v1856
      %v1896 = vadd.f32 %v1772, %v1858
      %v1897 = vadd.f32 %v1773, %v1861
      %v1898 = vadd.f32 %v1774, %v1863
      %v1899 = vadd.f32 %v1775, %v1866
      %v1900 = vadd.f32 %v1776, %v1868
      %v1901 = vld [vmem:[%s6] sm:$0x1]
      %v1903 = vlaneseq
      %v1904 = vshrl.u32 %v1903, 7
      %v1905 = vsub.s32 0, %v1904
      %v1906 = vrot.slane %v1901, %v1905
      %v1908 = vadd.f32 %v1885, %v1906
      %v1909 = vadd.f32 %v1886, %v1906
      %v1910 = vadd.f32 %v1887, %v1906
      %v1911 = vadd.f32 %v1888, %v1906
      %v1912 = vadd.f32 %v1889, %v1906
      %v1913 = vadd.f32 %v1890, %v1906
      %v1914 = vadd.f32 %v1891, %v1906
      %v1915 = vadd.f32 %v1892, %v1906
      %v1916 = vadd.f32 %v1893, %v1906
      %v1917 = vadd.f32 %v1894, %v1906
      %v1918 = vadd.f32 %v1895, %v1906
      %v1919 = vadd.f32 %v1896, %v1906
      %v1920 = vadd.f32 %v1897, %v1906
      %v1921 = vadd.f32 %v1898, %v1906
      %v1922 = vadd.f32 %v1899, %v1906
      %v1923 = vadd.f32 %v1900, %v1906
      %v1924 = vmax.f32 %v1908, 0.0
      %v1925 = vmax.f32 %v1909, 0.0
      %v1926 = vmax.f32 %v1910, 0.0
      %v1927 = vmax.f32 %v1911, 0.0
      %v1928 = vmax.f32 %v1912, 0.0
      %v1929 = vmax.f32 %v1913, 0.0
      %v1930 = vmax.f32 %v1914, 0.0
      %v1931 = vmax.f32 %v1915, 0.0
      %v1932 = vmax.f32 %v1916, 0.0
      %v1933 = vmax.f32 %v1917, 0.0
      %v1934 = vmax.f32 %v1918, 0.0
      %v1935 = vmax.f32 %v1919, 0.0
      %v1936 = vmax.f32 %v1920, 0.0
      %v1937 = vmax.f32 %v1921, 0.0
      %v1938 = vmax.f32 %v1922, 0.0
      %v1939 = vmax.f32 %v1923, 0.0
      %v1940 = vmin.f32 %v1924, 6.0
      %v1941 = vmin.f32 %v1925, 6.0
      %v1942 = vmin.f32 %v1926, 6.0
      %v1943 = vmin.f32 %v1927, 6.0
      %v1944 = vmin.f32 %v1928, 6.0
      %v1945 = vmin.f32 %v1929, 6.0
      %v1946 = vmin.f32 %v1930, 6.0
      %v1947 = vmin.f32 %v1931, 6.0
      %v1948 = vmin.f32 %v1932, 6.0
      %v1949 = vmin.f32 %v1933, 6.0
      %v1950 = vmin.f32 %v1934, 6.0
      %v1951 = vmin.f32 %v1935, 6.0
      %v1952 = vmin.f32 %v1936, 6.0
      %v1953 = vmin.f32 %v1937, 6.0
      %v1954 = vmin.f32 %v1938, 6.0
      %v1955 = vmin.f32 %v1939, 6.0
      %v1956 = vld [vmem:[%s7] sm:$0xff]
      %v1957 = vld [vmem:[%s7 + $0x8] sm:$0xff]
      %v1958 = vld [vmem:[%s8] sm:$0x1]
      %v1960 = vlaneseq
      %v1961 = vshrl.u32 %v1960, 7
      %v1962 = vsub.s32 0, %v1961
      %v1963 = vrot.slane %v1958, %v1962
      %vm1965 = vcmask 130048
      %v1967 = vsel %vm1965, %v1940, 0
      %v1970 = vsel %vm1965, %v1941, 0
      %v1973 = vsel %vm1965, %v1942, 0
      %v1976 = vsel %vm1965, %v1943, 0
      %v1979 = vsel %vm1965, %v1944, 0
      %v1982 = vsel %vm1965, %v1945, 0
      %v1985 = vsel %vm1965, %v1946, 0
      %v1988 = vsel %vm1965, %v1947, 0
      %v1991 = vsel %vm1965, %v1948, 0
      %v1994 = vsel %vm1965, %v1949, 0
      %v1997 = vsel %vm1965, %v1950, 0
      %v2000 = vsel %vm1965, %v1951, 0
      %v2003 = vsel %vm1965, %v1952, 0
      %v2006 = vsel %vm1965, %v1953, 0
      %v2009 = vsel %vm1965, %v1954, 0
      %v2012 = vsel %vm1965, %v1955, 0
      %2014 = vmatprep.subr.mxu0 0.0
      %2015 = vmatpush1.msra.mxu0 %v1956
      %2016 = vmatprep.subr.mxu0 0.0
      %2017 = vmatpush1.msra.mxu0 %v1957
      %2018 = vmatprep.subr.mxu0 0.0
      %2019 = vmatpush1.msra.mxu0 0.0
      %2020 = vmatprep.subr.mxu0 0.0
      %2021 = vmatpush1.msra.mxu0 0.0
      %2022 = vmatprep.subr.mxu0 0.0
      %2023 = vmatpush1.msra.mxu0 0.0
      %2024 = vmatprep.subr.mxu0 0.0
      %2025 = vmatpush1.msra.mxu0 0.0
      %2026 = vmatprep.subr.mxu0 0.0
      %2027 = vmatpush1.msra.mxu0 0.0
      %2028 = vmatprep.subr.mxu0 0.0
      %2029 = vmatpush1.msra.mxu0 0.0
      %2030 = vmatprep.subr.mxu0 0.0
      %2031 = vmatpush1.msra.mxu0 0.0
      %2032 = vmatprep.subr.mxu0 0.0
      %2033 = vmatpush1.msra.mxu0 0.0
      %2034 = vmatprep.subr.mxu0 0.0
      %2035 = vmatpush1.msra.mxu0 0.0
      %2036 = vmatprep.subr.mxu0 0.0
      %2037 = vmatpush1.msra.mxu0 0.0
      %2038 = vmatprep.subr.mxu0 0.0
      %2039 = vmatpush1.msra.mxu0 0.0
      %2040 = vmatprep.subr.mxu0 0.0
      %2041 = vmatpush1.msra.mxu0 0.0
      %2042 = vmatprep.subr.mxu0 0.0
      %2043 = vmatpush1.msra.mxu0 0.0
      %2044 = vmatprep.subr.mxu0 0.0
      %2045 = vmatpush1.msra.mxu0 0.0
      %2046 = vmatprep.subr.mxu0 0.0
      %2047 = vmatpush1.msra.mxu0 0.0
      %2048 = vmatprep.subr.mxu0 0.0
      %2049 = vmatpush1.msra.mxu0 0.0
      %2050 = vmatprep.subr.mxu0 0.0
      %2051 = vmatpush1.msra.mxu0 0.0
      %2052 = vmatprep.subr.mxu0 0.0
      %2053 = vmatpush1.msra.mxu0 0.0
      %2054 = vmatprep.subr.mxu0 0.0
      %2055 = vmatpush1.msra.mxu0 0.0
      %2056 = vmatprep.subr.mxu0 0.0
      %2057 = vmatpush1.msra.mxu0 0.0
      %2058 = vmatprep.subr.mxu0 0.0
      %2059 = vmatpush1.msra.mxu0 0.0
      %2060 = vmatprep.subr.mxu0 0.0
      %2061 = vmatpush1.msra.mxu0 0.0
      %2062 = vmatprep.subr.mxu0 0.0
      %2063 = vmatpush1.msra.mxu0 0.0
      %2064 = vmatprep.subr.mxu0 0.0
      %2065 = vmatpush1.msra.mxu0 0.0
      %2066 = vmatprep.subr.mxu0 0.0
      %2067 = vmatpush1.msra.mxu0 0.0
      %2068 = vmatprep.subr.mxu0 0.0
      %2069 = vmatpush1.msra.mxu0 0.0
      %2070 = vmatprep.subr.mxu0 0.0
      %2071 = vmatpush1.msra.mxu0 0.0
      %2072 = vmatprep.subr.mxu0 0.0
      %2073 = vmatpush1.msra.mxu0 0.0
      %2074 = vmatprep.subr.mxu0 0.0
      %2075 = vmatpush1.msra.mxu0 0.0
      %2076 = vmatprep.subr.mxu0 0.0
      %2077 = vmatpush1.msra.mxu0 0.0
      %2078 = vmatprep.mubr.f32.mxu0 0.0
      %2079 = vmatmul.mubr.f32.gmra.mrb[0].mxu0 %v1967
      %v2080 = vpop.f32.mrb[0].mxu0
      %v2081 = vadd.f32 %v1963, %v2080
      %v2082 = vpop.f32.mrb[0].mxu0
      %2083 = vmatprep.mubr.f32.mxu0 0.0
      %2084 = vmatmul.mubr.f32.gmra.mrb[0].mxu0 %v1970
      %v2085 = vpop.f32.mrb[0].mxu0
      %v2086 = vadd.f32 %v1963, %v2085
      %v2087 = vpop.f32.mrb[0].mxu0
      %2088 = vmatprep.mubr.f32.mxu0 0.0
      %2089 = vmatmul.mubr.f32.gmra.mrb[0].mxu0 %v1973
      %v2090 = vpop.f32.mrb[0].mxu0
      %v2091 = vadd.f32 %v1963, %v2090
      %v2092 = vpop.f32.mrb[0].mxu0
      %2093 = vmatprep.mubr.f32.mxu0 0.0
      %2094 = vmatmul.mubr.f32.gmra.mrb[0].mxu0 %v1976
      %v2095 = vpop.f32.mrb[0].mxu0
      %v2096 = vadd.f32 %v1963, %v2095
      %v2097 = vpop.f32.mrb[0].mxu0
      %2098 = vmatprep.mubr.f32.mxu0 0.0
      %2099 = vmatmul.mubr.f32.gmra.mrb[0].mxu0 %v1979
      %v2100 = vpop.f32.mrb[0].mxu0
      %v2101 = vadd.f32 %v1963, %v2100
      %v2102 = vpop.f32.mrb[0].mxu0
      %2103 = vmatprep.mubr.f32.mxu0 0.0
      %2104 = vmatmul.mubr.f32.gmra.mrb[0].mxu0 %v1982
      %v2105 = vpop.f32.mrb[0].mxu0
      %v2106 = vadd.f32 %v1963, %v2105
      %v2107 = vpop.f32.mrb[0].mxu0
      %2108 = vmatprep.mubr.f32.mxu0 0.0
      %2109 = vmatmul.mubr.f32.gmra.mrb[0].mxu0 %v1985
      %v2110 = vpop.f32.mrb[0].mxu0
      %v2111 = vadd.f32 %v1963, %v2110
      %v2112 = vpop.f32.mrb[0].mxu0
      %2113 = vmatprep.mubr.f32.mxu0 0.0
      %2114 = vmatmul.mubr.f32.gmra.mrb[0].mxu0 %v1988
      %v2115 = vpop.f32.mrb[0].mxu0
      %v2116 = vadd.f32 %v1963, %v2115
      %v2117 = vpop.f32.mrb[0].mxu0
      %2118 = vmatprep.mubr.f32.mxu0 0.0
      %2119 = vmatmul.mubr.f32.gmra.mrb[0].mxu0 %v1991
      %v2120 = vpop.f32.mrb[0].mxu0
      %v2121 = vadd.f32 %v1963, %v2120
      %v2122 = vpop.f32.mrb[0].mxu0
      %2123 = vmatprep.mubr.f32.mxu0 0.0
      %2124 = vmatmul.mubr.f32.gmra.mrb[0].mxu0 %v1994
      %v2125 = vpop.f32.mrb[0].mxu0
      %v2126 = vadd.f32 %v1963, %v2125
      %v2127 = vpop.f32.mrb[0].mxu0
      %2128 = vmatprep.mubr.f32.mxu0 0.0
      %2129 = vmatmul.mubr.f32.gmra.mrb[0].mxu0 %v1997
      %v2130 = vpop.f32.mrb[0].mxu0
      %v2131 = vadd.f32 %v1963, %v2130
      %v2132 = vpop.f32.mrb[0].mxu0
      %2133 = vmatprep.mubr.f32.mxu0 0.0
      %2134 = vmatmul.mubr.f32.gmra.mrb[0].mxu0 %v2000
      %v2135 = vpop.f32.mrb[0].mxu0
      %v2136 = vadd.f32 %v1963, %v2135
      %v2137 = vpop.f32.mrb[0].mxu0
      %2138 = vmatprep.mubr.f32.mxu0 0.0
      %2139 = vmatmul.mubr.f32.gmra.mrb[0].mxu0 %v2003
      %v2140 = vpop.f32.mrb[0].mxu0
      %v2141 = vadd.f32 %v1963, %v2140
      %v2142 = vpop.f32.mrb[0].mxu0
      %2143 = vmatprep.mubr.f32.mxu0 0.0
      %2144 = vmatmul.mubr.f32.gmra.mrb[0].mxu0 %v2006
      %v2145 = vpop.f32.mrb[0].mxu0
      %v2146 = vadd.f32 %v1963, %v2145
      %v2147 = vpop.f32.mrb[0].mxu0
      %2148 = vmatprep.mubr.f32.mxu0 0.0
      %2149 = vmatmul.mubr.f32.gmra.mrb[0].mxu0 %v2009
      %v2150 = vpop.f32.mrb[0].mxu0
      %v2151 = vadd.f32 %v1963, %v2150
      %v2152 = vpop.f32.mrb[0].mxu0
      %2153 = vmatprep.mubr.f32.mxu0 0.0
      %2154 = vmatmul.mubr.f32.gmra.mrb[0].mxu0 %v2012
      %v2155 = vpop.f32.mrb[0].mxu0
      %v2156 = vadd.f32 %v1963, %v2155
      %v2157 = vpop.f32.mrb[0].mxu0
      %2158 = vdwg.mxu0
      %v2183 = vrot.slane %v501, 1
      %v2184 = vrot.slane %v502, 1
      %v2185 = vsel %vm1135, %v2183, %v2184
      %v2186 = vrot.slane %v503, 1
      %v2187 = vsel %vm1135, %v2184, %v2186
      %v2188 = vrot.slane %v504, 1
      %v2189 = vrot.slane %v505, 1
      %v2190 = vsel %vm1135, %v2188, %v2189
      %v2191 = vrot.slane %v506, 1
      %v2192 = vsel %vm1135, %v2189, %v2191
      %v2193 = vrot.slane %v507, 1
      %v2194 = vrot.slane %v508, 1
      %v2195 = vsel %vm1135, %v2193, %v2194
      %v2196 = vrot.slane %v509, 1
      %v2197 = vsel %vm1135, %v2194, %v2196
      %v2198 = vrot.slane %v510, 1
      %v2199 = vrot.slane %v511, 1
      %v2200 = vsel %vm1135, %v2198, %v2199
      %v2201 = vrot.slane %v512, 1
      %v2202 = vsel %vm1135, %v2199, %v2201
      %v2203 = vrot.slane %v513, 1
      %v2204 = vrot.slane %v514, 1
      %v2205 = vsel %vm1135, %v2203, %v2204
      %v2206 = vrot.slane %v515, 1
      %v2207 = vsel %vm1135, %v2204, %v2206
      %v2208 = vrot.slane %v516, 1
      %v2209 = vrot.slane %v517, 1
      %v2210 = vsel %vm1135, %v2208, %v2209
      %v2211 = vrot.slane %v518, 1
      %v2212 = vsel %vm1135, %v2209, %v2211
      %v2213 = vrot.slane %v519, 1
      %v2214 = vrot.slane %v520, 1
      %v2215 = vsel %vm1135, %v2213, %v2214
      %v2216 = vrot.slane %v521, 1
      %v2217 = vsel %vm1135, %v2214, %v2216
      %v2218 = vrot.slane %v522, 1
      %v2219 = vrot.slane %v523, 1
      %v2220 = vsel %vm1135, %v2218, %v2219
      %v2221 = vrot.slane %v524, 1
      %v2222 = vsel %vm1135, %v2219, %v2221
      %v2239 = vadd.f32 %v2081, %v2185
      %v2240 = vadd.f32 %v2086, %v2187
      %v2241 = vadd.f32 %v2091, %v2190
      %v2242 = vadd.f32 %v2096, %v2192
      %v2243 = vadd.f32 %v2101, %v2195
      %v2244 = vadd.f32 %v2106, %v2197
      %v2245 = vadd.f32 %v2111, %v2200
      %v2246 = vadd.f32 %v2116, %v2202
      %v2247 = vadd.f32 %v2121, %v2205
      %v2248 = vadd.f32 %v2126, %v2207
      %v2249 = vadd.f32 %v2131, %v2210
      %v2250 = vadd.f32 %v2136, %v2212
      %v2251 = vadd.f32 %v2141, %v2215
      %v2252 = vadd.f32 %v2146, %v2217
      %v2253 = vadd.f32 %v2151, %v2220
      %v2254 = vadd.f32 %v2156, %v2222
      %2255 = vst.msk [vmem:[%s499] sm:$0xff] %vm528, %v2239
      %2256 = vst.msk [vmem:[%s499 + $0x8] sm:$0xff] %vm528, %v2240
      %2257 = vst.msk [vmem:[%s499 + $0x10] sm:$0xff] %vm528, %v2241
      %2258 = vst.msk [vmem:[%s499 + $0x18] sm:$0xff] %vm528, %v2242
      %2259 = vst.msk [vmem:[%s499 + $0x20] sm:$0xff] %vm528, %v2243
      %2260 = vst.msk [vmem:[%s499 + $0x28] sm:$0xff] %vm528, %v2244
      %2261 = vst.msk [vmem:[%s499 + $0x30] sm:$0xff] %vm528, %v2245
      %2262 = vst.msk [vmem:[%s499 + $0x38] sm:$0xff] %vm528, %v2246
      %2263 = vst.msk [vmem:[%s499 + $0x40] sm:$0xff] %vm528, %v2247
      %2264 = vst.msk [vmem:[%s499 + $0x48] sm:$0xff] %vm528, %v2248
      %2265 = vst.msk [vmem:[%s499 + $0x50] sm:$0xff] %vm528, %v2249
      %2266 = vst.msk [vmem:[%s499 + $0x58] sm:$0xff] %vm528, %v2250
      %2267 = vst.msk [vmem:[%s499 + $0x60] sm:$0xff] %vm528, %v2251
      %2268 = vst.msk [vmem:[%s499 + $0x68] sm:$0xff] %vm528, %v2252
      %2269 = vst.msk [vmem:[%s499 + $0x70] sm:$0xff] %vm528, %v2253
      %2270 = vst.msk [vmem:[%s499 + $0x78] sm:$0xff] %vm528, %v2254
      %s2271 = smul.u32 8, %s25
      %p2272 = scmp.lt.s32.totalorder %s24, 1
      %s2273 = scalar_select %p2272, %s24, 1
      %p2274 = scmp.lt.s32.totalorder %s2271, 15
      %s2275 = scalar_select %p2274, %s2271, 15
      %s2276 = smul.addr %s2275, 2
      %s2277 = smul.addr %s2273, 32
      %s2278 = sadd.s32 %s2276, %s2277
      %s2279 = smul.addr %s2278, 8
      %s2280 = scalar_lea.vmem %s9, %s2279
      // Predicated region
      $region57: #{tpu_custom_call.1} parent=55 // pred_check
        %p2281 = pneg %p278
      $region58: #{tpu_custom_call.1} parent=55 // pred_check_branch
        %2283 = sbr.rel (%p2281) target = $region60
      $region59: #{tpu_custom_call.1} parent=55 // pred_region
        %s2284 = smul.u32 8, %s25
      $region60: #{tpu_custom_call.1} parent=55 // pred_fallthru
        _
    $region56: #{tpu_custom_call.1} parent=5 // pred_fallthru
      _
    %p2285 = scmp.le.s32.totalorder 2, %s15
    // Predicated region
    $region61: #{tpu_custom_call.1} parent=5 // pred_check
      %p2286 = pneg %p2285
    $region62: #{tpu_custom_call.1} parent=5 // pred_check_branch
      %2288 = sbr.rel (%p2286) target = $region64
    $region63: #{tpu_custom_call.1} parent=5 // pred_region
      %s2289 = ssub.s32 %s15, 2
      // Predicated region
      $region65: #{tpu_custom_call.1} parent=63 // pred_check
        %p2290 = pneg %p284
      $region66: #{tpu_custom_call.1} parent=63 // pred_check_branch
        %2292 = sbr.rel (%p2290) target = $region68
      $region67: #{tpu_custom_call.1} parent=63 // pred_region
        %s2293 = smul.u32 8, %s27
        %p2294 = scmp.lt.s32.totalorder %s26, 1
        %s2295 = scalar_select %p2294, %s26, 1
        %p2296 = scmp.lt.s32.totalorder %s2293, 15
        %s2297 = scalar_select %p2296, %s2293, 15
        %s2298 = smul.addr %s2297, 2
        %s2299 = smul.addr %s2295, 32
        %s2300 = sadd.s32 %s2298, %s2299
        %s2301 = smul.addr %s2300, 8
        %s2302 = scalar_lea.vmem %s9, %s2301
      $region68: #{tpu_custom_call.1} parent=63 // pred_fallthru
        _
    $region64: #{tpu_custom_call.1} parent=5 // pred_fallthru
      _
  $region6: #{tpu_custom_call.1} parent=0 // loop_footer
    %s19 = sadd.s32 1, %s15
  $region7: #{tpu_custom_call.1} parent=0 // loop_footer_branch
    %14 = sbr.rel target = $region3
  $region8: #{tpu_custom_call.1} parent=0 // loop_exit
    _

</llo_original>
